<compile_context>
chip_gen: v5e
topology: v5e:2x2
jax: 0.10.0
libtpu: 0.0.40
codegen_flags: <defaults>
</compile_context>

<pallas_src>
import jax
import jax.numpy as jnp
from jax.experimental import pallas as pl
from jax.experimental.pallas import tpu as pltpu


def _act_fn(name):
    """JAX equivalent of activation_helper (elementwise activations only)."""
    if name == "relu":
        return lambda y: jnp.maximum(y, 0.0)
    if name == "sigmoid":
        return jax.nn.sigmoid
    if name == "tanh":
        return jnp.tanh
    if name == "leakyrelu":
        return lambda y: jnp.where(y >= 0, y, 0.01 * y)
    if name is None:
        return lambda y: y
    # TODO(synk): 'glu' (channel-split gating along dim=1) not implemented in-kernel.
    raise ValueError("unsupported activation: %s" % name)


def _conv_kh_weights(w4, in_width, channels_before_width):
    """Per-kh block-Toeplitz weights: a stride-1 VALID conv becomes KH accumulating matmuls.

    w4: (KH, KW, Cin, Cout).
    Patch lane order is (ci, w) if channels_before_width (used for the NCHW network input,
    so no in-kernel NCHW->NHWC transpose is needed), else (w, ci) (matches the
    (rows, B, W*C) activation slabs produced by previous layers).
    Returns (KH, Cin * in_width, OW * Cout).
    """
    KH, KW, Cin, Cout = w4.shape
    OW = in_width - KW + 1
    if channels_before_width:
        wt = jnp.transpose(w4, (0, 2, 1, 3))                  # (KH, Cin, KW, Cout)
        wb = jnp.zeros((KH, Cin, in_width, OW, Cout), w4.dtype)
        for ow in range(OW):
            wb = wb.at[:, :, ow:ow + KW, ow, :].set(wt)
    else:
        wb = jnp.zeros((KH, in_width, Cin, OW, Cout), w4.dtype)
        for ow in range(OW):
            wb = wb.at[:, ow:ow + KW, :, ow, :].set(w4)
    return wb.reshape(KH, -1, OW * Cout)


def _make_fused_kernel(layer_meta, cout, act, b_tile):
    """Fused kernel: all layers for B_TILE images per grid step (batch on sublanes)."""

    def kernel(x_ref, *refs):
        o_ref = refs[-1]
        img = x_ref[...]                                    # (H0, B, C0*W0) f32

        for li, (H, W, C, KH, KW, pool, PH, PW) in enumerate(layer_meta):
            w_ref = refs[2 * li]                            # (KH, C*W, OW*cout) bf16
            b_ref = refs[2 * li + 1]                        # (1, OW*cout)       f32
            OH, OW = H - KH + 1, W - KW + 1
            CW = C * W
            NOUT = OW * cout

            # Conv (+ folded bias/BN) as KH accumulating MXU dots; no lane-axis concat.
            # Leading-dim slice + (OH, B, CW)->(OH*B, CW) fold is layout-preserving
            # because B is a multiple of 8.
            acc = jnp.zeros((OH * b_tile, NOUT), jnp.float32)
            for kh in range(KH):
                slab = img[kh:kh + OH].reshape(OH * b_tile, CW)
                acc = acc + jnp.dot(slab.astype(jnp.bfloat16), w_ref[kh],
                                    preferred_element_type=jnp.float32)
            y = acc + b_ref[...]

            if pool:
                y = act(y).reshape(OH, b_tile, NOUT)
                FH, FW = OH - PH + 1, OW - PW + 1
                # Separable stride-1 max pool: lanes (width) first, then rows (height).
                m = y[:, :, 0:FW * cout]
                for pw in range(1, PW):
                    m = jnp.maximum(m, y[:, :, pw * cout:(pw + FW) * cout])
                out = m[0:FH]
                for ph in range(1, PH):
                    out = jnp.maximum(out, m[ph:ph + FH])
                img = out                                   # (FH, B, FW*cout)
            else:
                img = y                                     # last layer: no act / pool

        # Last layer output rows are ordered (oh, b); stored as a direct 2-D block.
        o_ref[...] = img

    return kernel


class CNN2dPallas:
    """JAX/Pallas port of CNN2dModule (eval-mode semantics), fully fused on TPU."""

    def __init__(self, in_channels, out_channels, num_layers=3, h_model=20,
                 w_model=20, activation="relu", dropout=0.5,
                 key=jax.random.PRNGKey(0)):
        self.in_channels = in_channels
        self.out_channels = out_channels
        self.num_layers = num_layers
        self.h_model = h_model
        self.w_model = w_model
        self.act = _act_fn(activation)

        ks1h = (h_model - 1) // (2 * (num_layers - 1)) + 1
        ks1w = (w_model - 1) // (2 * (num_layers - 1)) + 1
        ks2h = h_model - (ks1h - 1) * 2 * (num_layers - 1)
        ks2w = w_model - (ks1w - 1) * 2 * (num_layers - 1)
        self.kernel_size1 = (ks1h, ks1w)
        self.kernel_size2 = (ks2h, ks2w)

        eps = 1e-5
        self.raw_params = []    # (w4, bias, bn_scale, bn_shift)            -- XLA reference
        self.layer_params = []  # (w_kh bf16 (KH,CW,OW*Co), b f32 (1,OW*Co)) -- kernel
        self.layer_meta = []    # (H, W, Cin, KH, KW, pool, PH, PW)
        self.matmul_flops_per_image = 0

        cur_h, cur_w = h_model, w_model
        cin = in_channels
        for i in range(num_layers):
            last = i == num_layers - 1
            KH, KW = self.kernel_size2 if last else self.kernel_size1
            PH, PW = self.kernel_size1
            pool = not last

            key, wk = jax.random.split(key)
            # Kaiming normal, mode='fan_out', nonlinearity='relu' -> std = sqrt(2/fan_out)
            fan_out = out_channels * KH * KW
            std = (2.0 / fan_out) ** 0.5
            w4 = std * jax.random.normal(wk, (KH, KW, cin, out_channels), jnp.float32)
            b = jnp.zeros((out_channels,), jnp.float32)
            # BatchNorm2d defaults (eval): gamma=1, beta=0, running_mean=0, running_var=1.
            gamma = jnp.ones((out_channels,), jnp.float32)
            beta = jnp.zeros((out_channels,), jnp.float32)
            rmean = jnp.zeros((out_channels,), jnp.float32)
            rvar = jnp.ones((out_channels,), jnp.float32)
            scale = gamma / jnp.sqrt(rvar + eps)
            shift = beta - rmean * scale
            self.raw_params.append((w4, b, scale, shift))

            # Fold BN into conv weight/bias, then build bf16 per-kh block-Toeplitz weights.
            w_folded = w4 * scale[None, None, None, :]
            b_folded = b * scale + shift
            OH, OW = cur_h - KH + 1, cur_w - KW + 1
            w_kh = _conv_kh_weights(w_folded, cur_w,
                                    channels_before_width=(i == 0)).astype(jnp.bfloat16)
            b_big = jnp.tile(b_folded, OW).reshape(1, OW * out_channels)
            self.layer_params.append((w_kh, b_big))
            self.layer_meta.append((cur_h, cur_w, cin, KH, KW, pool, PH, PW))
            self.matmul_flops_per_image += 2 * OH * (KH * cin * cur_w) * (OW * out_channels)

            if pool:
                cur_h, cur_w = OH - PH + 1, OW - PW + 1
            else:
                cur_h, cur_w = OH, OW
            cin = out_channels

        self.out_spatial = (cur_h, cur_w)

    def __call__(self, x_nchw, batch_tile=None):
        N, C, H, W = x_nchw.shape
        assert C == self.in_channels and H == self.h_model and W == self.w_model
        out_h, out_w = self.out_spatial
        cout = self.out_channels

        # Batch tile: multiple of 8 (keeps in-kernel (rows,B,L)<->(rows*B,L) folds
        # layout-preserving) and, when possible, >= 2 grid steps so v7x's two TensorCores
        # both get work. On single-TC v5e/v6e larger tiles are simply fewer serial steps.
        if batch_tile is None:
            batch_tile = 8
            for b in (16, 32, 64):
                if N > b:
                    batch_tile = b
        n_pad = (-N) % batch_tile
        if n_pad:
            x_nchw = jnp.concatenate(
                [x_nchw, jnp.zeros((n_pad, C, H, W), x_nchw.dtype)], axis=0)
        n_total = N + n_pad
        grid = n_total // batch_tile

        # Layer-0 relayout in the wrapper (one XLA transpose amortized over the batch):
        # (N, C, H, W) -> (H, N, C*W); batch on the sublane axis, lanes ordered (ci, w).
        x_slab = jnp.transpose(x_nchw, (2, 0, 1, 3)).reshape(H, n_total, C * W)

        in_specs = [pl.BlockSpec((H, batch_tile, C * W), lambda n: (0, n, 0))]
        args = [x_slab]
        for (w_kh, b_big) in self.layer_params:
            in_specs.append(pl.BlockSpec(w_kh.shape, lambda n: (0, 0, 0)))
            in_specs.append(pl.BlockSpec(b_big.shape, lambda n: (0, 0)))
            args += [w_kh, b_big]

        out_rows_per_step = out_h * batch_tile
        out_lanes = out_w * cout
        kernel = _make_fused_kernel(self.layer_meta, cout, self.act, batch_tile)

        weight_bytes = sum(int(w.nbytes) + int(b.nbytes) for w, b in self.layer_params)
        cost = pl.CostEstimate(
            flops=int(self.matmul_flops_per_image) * n_total,
            transcendentals=0,
            bytes_accessed=int(x_slab.nbytes) + grid * weight_bytes
            + grid * out_rows_per_step * out_lanes * 4)

        out2d = pl.pallas_call(
            kernel,
            grid=(grid,),
            in_specs=in_specs,
            out_specs=pl.BlockSpec((out_rows_per_step, out_lanes), lambda n: (n, 0)),
            out_shape=jax.ShapeDtypeStruct((grid * out_rows_per_step, out_lanes),
                                           jnp.float32),
            compiler_params=pltpu.CompilerParams(
                dimension_semantics=("parallel",),     # v7x: steps shard across both TCs
                vmem_limit_bytes=32 * 1024 * 1024),
            cost_estimate=cost,
        )(*args)

        # Rows are ordered (step, oh, b); unpack to NCHW and drop batch padding.
        out = out2d.reshape(grid, out_h, batch_tile, out_w, cout)
        out = jnp.transpose(out, (0, 2, 4, 1, 3)).reshape(n_total, cout, out_h, out_w)
        # Dropout: identity in eval mode (see TODO at top of file).
        return out[:N]


def _reference_forward(model, x_nchw):
    """Pure-XLA reference (lax conv / reduce_window) for a numerical sanity check."""
    y = x_nchw
    for i, (w4, b, scale, shift) in enumerate(model.raw_params):
        rhs = jnp.transpose(w4, (3, 2, 0, 1))  # (Cout, Cin, KH, KW)
        y = jax.lax.conv_general_dilated(
            y, rhs, window_strides=(1, 1), padding="VALID",
            dimension_numbers=("NCHW", "OIHW", "NCHW"),
            precision=jax.lax.Precision.HIGHEST)
        y = y + b.reshape(1, -1, 1, 1)
        y = y * scale.reshape(1, -1, 1, 1) + shift.reshape(1, -1, 1, 1)
        if i != model.num_layers - 1:
            y = model.act(y)
            ph, pw = model.kernel_size1
            y = jax.lax.reduce_window(y, -jnp.inf, jax.lax.max,
                                      (1, 1, ph, pw), (1, 1, 1, 1), "VALID")
    return y


if __name__ == "__main__":
    key = jax.random.PRNGKey(0)
    kx, kp = jax.random.split(key)

    N, C_IN, C_OUT = 16, 4, 8
    H = W = 20  # matches default h_model/w_model; output spatial collapses to 1x1

    x = jax.random.normal(kx, (N, C_IN, H, W), jnp.float32)

    model = CNN2dPallas(C_IN, C_OUT, num_layers=3, h_model=H, w_model=W,
                        activation="relu", dropout=0.5, key=kp)
    out = model(x)   # B_TILE=8 -> grid of 2 "parallel" steps, M=128 on the layer-0 matmul
    jax.block_until_ready(out)

    assert out.shape == (N, C_OUT, 1, 1), out.shape
    assert bool(jnp.all(jnp.isfinite(out)))

    # Numerical check against a pure-XLA f32 reference (tolerance covers bf16 MXU inputs).
    ref = _reference_forward(model, x)
    assert ref.shape == out.shape, (ref.shape, out.shape)
    rel_err = float(jnp.max(jnp.abs(out - ref)) / (jnp.max(jnp.abs(ref)) + 1e-6))
    assert rel_err < 0.05, rel_err

    print("KERNEL_OK")
</pallas_src>

<mosaic_0001>
module attributes {stable_mosaic.version = 11 : i64} {
  func.func @kernel(%arg0: i32, %arg1: memref<20x8x80xf32, #tpu.memory_space<vmem>>, %arg2: memref<5x80x128xbf16, #tpu.memory_space<vmem>>, %arg3: memref<1x128xf32, #tpu.memory_space<vmem>>, %arg4: memref<5x96x64xbf16, #tpu.memory_space<vmem>>, %arg5: memref<1x64xf32, #tpu.memory_space<vmem>>, %arg6: memref<4x32x8xbf16, #tpu.memory_space<vmem>>, %arg7: memref<1x8xf32, #tpu.memory_space<vmem>>, %arg8: memref<8x8xf32, #tpu.memory_space<vmem>>) attributes {dimension_semantics = [#tpu.dimension_semantics<parallel>], iteration_bounds = array<i64: 2>, scalar_prefetch = 0 : i64, scratch_operands = 0 : i64, tpu.core_type = #tpu.core_type<tc>, window_params = [{transform_indices = @transform_0, window_bounds = array<i64: 20, 8, 80>}, {pipeline_mode = #tpu.pipeline_mode<synchronous>, transform_indices = @transform_1, window_bounds = array<i64: 5, 80, 128>}, {pipeline_mode = #tpu.pipeline_mode<synchronous>, transform_indices = @transform_2, window_bounds = array<i64: 1, 128>}, {pipeline_mode = #tpu.pipeline_mode<synchronous>, transform_indices = @transform_3, window_bounds = array<i64: 5, 96, 64>}, {pipeline_mode = #tpu.pipeline_mode<synchronous>, transform_indices = @transform_4, window_bounds = array<i64: 1, 64>}, {pipeline_mode = #tpu.pipeline_mode<synchronous>, transform_indices = @transform_5, window_bounds = array<i64: 4, 32, 8>}, {pipeline_mode = #tpu.pipeline_mode<synchronous>, transform_indices = @transform_6, window_bounds = array<i64: 1, 8>}, {transform_indices = @transform_7, window_bounds = array<i64: 8, 8>}]} {
    %c0 = arith.constant 0 : index
    %c0_0 = arith.constant 0 : index
    %c0_1 = arith.constant 0 : index
    %0 = vector.load %arg1[%c0, %c0_0, %c0_1] : memref<20x8x80xf32, #tpu.memory_space<vmem>>, vector<20x8x80xf32>
    %cst = arith.constant 0.000000e+00 : f32
    %1 = vector.broadcast %cst : f32 to vector<128x128xf32>
    %2 = vector.extract_strided_slice %0 {offsets = [0, 0, 0], sizes = [16, 8, 80], strides = [1, 1, 1]} : vector<20x8x80xf32> to vector<16x8x80xf32>
    %3 = vector.shape_cast %2 : vector<16x8x80xf32> to vector<128x80xf32>
    %4 = arith.truncf %3 : vector<128x80xf32> to vector<128x80xbf16>
    %c0_2 = arith.constant 0 : index
    %c0_3 = arith.constant 0 : index
    %c0_4 = arith.constant 0 : index
    %5 = vector.load %arg2[%c0_2, %c0_3, %c0_4] : memref<5x80x128xbf16, #tpu.memory_space<vmem>>, vector<1x80x128xbf16>
    %6 = vector.shape_cast %5 : vector<1x80x128xbf16> to vector<80x128xbf16>
    %cst_5 = arith.constant dense<0.000000e+00> : vector<128x128xf32>
    %7 = tpu.matmul %4, %6, %cst_5 {dimension_numbers = #tpu.dot_dimension_numbers<[1], [0], [0], [1], [0, 0, 1, 1], [], []>} : vector<128x80xbf16>, vector<80x128xbf16>, vector<128x128xf32> -> vector<128x128xf32>
    %8 = arith.addf %1, %7 : vector<128x128xf32>
    %9 = vector.extract_strided_slice %0 {offsets = [1, 0, 0], sizes = [16, 8, 80], strides = [1, 1, 1]} : vector<20x8x80xf32> to vector<16x8x80xf32>
    %10 = vector.shape_cast %9 : vector<16x8x80xf32> to vector<128x80xf32>
    %11 = arith.truncf %10 : vector<128x80xf32> to vector<128x80xbf16>
    %c1 = arith.constant 1 : index
    %c0_6 = arith.constant 0 : index
    %c0_7 = arith.constant 0 : index
    %12 = vector.load %arg2[%c1, %c0_6, %c0_7] : memref<5x80x128xbf16, #tpu.memory_space<vmem>>, vector<1x80x128xbf16>
    %13 = vector.shape_cast %12 : vector<1x80x128xbf16> to vector<80x128xbf16>
    %cst_8 = arith.constant dense<0.000000e+00> : vector<128x128xf32>
    %14 = tpu.matmul %11, %13, %cst_8 {dimension_numbers = #tpu.dot_dimension_numbers<[1], [0], [0], [1], [0, 0, 1, 1], [], []>} : vector<128x80xbf16>, vector<80x128xbf16>, vector<128x128xf32> -> vector<128x128xf32>
    %15 = arith.addf %8, %14 : vector<128x128xf32>
    %16 = vector.extract_strided_slice %0 {offsets = [2, 0, 0], sizes = [16, 8, 80], strides = [1, 1, 1]} : vector<20x8x80xf32> to vector<16x8x80xf32>
    %17 = vector.shape_cast %16 : vector<16x8x80xf32> to vector<128x80xf32>
    %18 = arith.truncf %17 : vector<128x80xf32> to vector<128x80xbf16>
    %c2 = arith.constant 2 : index
    %c0_9 = arith.constant 0 : index
    %c0_10 = arith.constant 0 : index
    %19 = vector.load %arg2[%c2, %c0_9, %c0_10] : memref<5x80x128xbf16, #tpu.memory_space<vmem>>, vector<1x80x128xbf16>
    %20 = vector.shape_cast %19 : vector<1x80x128xbf16> to vector<80x128xbf16>
    %cst_11 = arith.constant dense<0.000000e+00> : vector<128x128xf32>
    %21 = tpu.matmul %18, %20, %cst_11 {dimension_numbers = #tpu.dot_dimension_numbers<[1], [0], [0], [1], [0, 0, 1, 1], [], []>} : vector<128x80xbf16>, vector<80x128xbf16>, vector<128x128xf32> -> vector<128x128xf32>
    %22 = arith.addf %15, %21 : vector<128x128xf32>
    %23 = vector.extract_strided_slice %0 {offsets = [3, 0, 0], sizes = [16, 8, 80], strides = [1, 1, 1]} : vector<20x8x80xf32> to vector<16x8x80xf32>
    %24 = vector.shape_cast %23 : vector<16x8x80xf32> to vector<128x80xf32>
    %25 = arith.truncf %24 : vector<128x80xf32> to vector<128x80xbf16>
    %c3 = arith.constant 3 : index
    %c0_12 = arith.constant 0 : index
    %c0_13 = arith.constant 0 : index
    %26 = vector.load %arg2[%c3, %c0_12, %c0_13] : memref<5x80x128xbf16, #tpu.memory_space<vmem>>, vector<1x80x128xbf16>
    %27 = vector.shape_cast %26 : vector<1x80x128xbf16> to vector<80x128xbf16>
    %cst_14 = arith.constant dense<0.000000e+00> : vector<128x128xf32>
    %28 = tpu.matmul %25, %27, %cst_14 {dimension_numbers = #tpu.dot_dimension_numbers<[1], [0], [0], [1], [0, 0, 1, 1], [], []>} : vector<128x80xbf16>, vector<80x128xbf16>, vector<128x128xf32> -> vector<128x128xf32>
    %29 = arith.addf %22, %28 : vector<128x128xf32>
    %30 = vector.extract_strided_slice %0 {offsets = [4, 0, 0], sizes = [16, 8, 80], strides = [1, 1, 1]} : vector<20x8x80xf32> to vector<16x8x80xf32>
    %31 = vector.shape_cast %30 : vector<16x8x80xf32> to vector<128x80xf32>
    %32 = arith.truncf %31 : vector<128x80xf32> to vector<128x80xbf16>
    %c4 = arith.constant 4 : index
    %c0_15 = arith.constant 0 : index
    %c0_16 = arith.constant 0 : index
    %33 = vector.load %arg2[%c4, %c0_15, %c0_16] : memref<5x80x128xbf16, #tpu.memory_space<vmem>>, vector<1x80x128xbf16>
    %34 = vector.shape_cast %33 : vector<1x80x128xbf16> to vector<80x128xbf16>
    %cst_17 = arith.constant dense<0.000000e+00> : vector<128x128xf32>
    %35 = tpu.matmul %32, %34, %cst_17 {dimension_numbers = #tpu.dot_dimension_numbers<[1], [0], [0], [1], [0, 0, 1, 1], [], []>} : vector<128x80xbf16>, vector<80x128xbf16>, vector<128x128xf32> -> vector<128x128xf32>
    %36 = arith.addf %29, %35 : vector<128x128xf32>
    %c0_18 = arith.constant 0 : index
    %c0_19 = arith.constant 0 : index
    %37 = vector.load %arg3[%c0_18, %c0_19] : memref<1x128xf32, #tpu.memory_space<vmem>>, vector<1x128xf32>
    %38 = vector.broadcast %37 : vector<1x128xf32> to vector<128x128xf32>
    %39 = arith.addf %36, %38 : vector<128x128xf32>
    %cst_20 = arith.constant 0.000000e+00 : f32
    %40 = vector.broadcast %cst_20 : f32 to vector<128x128xf32>
    %41 = arith.maximumf %39, %40 : vector<128x128xf32>
    %42 = vector.shape_cast %41 : vector<128x128xf32> to vector<16x8x128xf32>
    %43 = vector.extract_strided_slice %42 {offsets = [0, 0, 0], sizes = [16, 8, 96], strides = [1, 1, 1]} : vector<16x8x128xf32> to vector<16x8x96xf32>
    %44 = vector.extract_strided_slice %42 {offsets = [0, 0, 8], sizes = [16, 8, 96], strides = [1, 1, 1]} : vector<16x8x128xf32> to vector<16x8x96xf32>
    %45 = arith.maximumf %43, %44 : vector<16x8x96xf32>
    %46 = vector.extract_strided_slice %42 {offsets = [0, 0, 16], sizes = [16, 8, 96], strides = [1, 1, 1]} : vector<16x8x128xf32> to vector<16x8x96xf32>
    %47 = arith.maximumf %45, %46 : vector<16x8x96xf32>
    %48 = vector.extract_strided_slice %42 {offsets = [0, 0, 24], sizes = [16, 8, 96], strides = [1, 1, 1]} : vector<16x8x128xf32> to vector<16x8x96xf32>
    %49 = arith.maximumf %47, %48 : vector<16x8x96xf32>
    %50 = vector.extract_strided_slice %42 {offsets = [0, 0, 32], sizes = [16, 8, 96], strides = [1, 1, 1]} : vector<16x8x128xf32> to vector<16x8x96xf32>
    %51 = arith.maximumf %49, %50 : vector<16x8x96xf32>
    %52 = vector.extract_strided_slice %51 {offsets = [0, 0, 0], sizes = [12, 8, 96], strides = [1, 1, 1]} : vector<16x8x96xf32> to vector<12x8x96xf32>
    %53 = vector.extract_strided_slice %51 {offsets = [1, 0, 0], sizes = [12, 8, 96], strides = [1, 1, 1]} : vector<16x8x96xf32> to vector<12x8x96xf32>
    %54 = arith.maximumf %52, %53 : vector<12x8x96xf32>
    %55 = vector.extract_strided_slice %51 {offsets = [2, 0, 0], sizes = [12, 8, 96], strides = [1, 1, 1]} : vector<16x8x96xf32> to vector<12x8x96xf32>
    %56 = arith.maximumf %54, %55 : vector<12x8x96xf32>
    %57 = vector.extract_strided_slice %51 {offsets = [3, 0, 0], sizes = [12, 8, 96], strides = [1, 1, 1]} : vector<16x8x96xf32> to vector<12x8x96xf32>
    %58 = arith.maximumf %56, %57 : vector<12x8x96xf32>
    %59 = vector.extract_strided_slice %51 {offsets = [4, 0, 0], sizes = [12, 8, 96], strides = [1, 1, 1]} : vector<16x8x96xf32> to vector<12x8x96xf32>
    %60 = arith.maximumf %58, %59 : vector<12x8x96xf32>
    %cst_21 = arith.constant 0.000000e+00 : f32
    %61 = vector.broadcast %cst_21 : f32 to vector<64x64xf32>
    %62 = vector.extract_strided_slice %60 {offsets = [0, 0, 0], sizes = [8, 8, 96], strides = [1, 1, 1]} : vector<12x8x96xf32> to vector<8x8x96xf32>
    %63 = vector.shape_cast %62 : vector<8x8x96xf32> to vector<64x96xf32>
    %64 = arith.truncf %63 : vector<64x96xf32> to vector<64x96xbf16>
    %c0_22 = arith.constant 0 : index
    %c0_23 = arith.constant 0 : index
    %c0_24 = arith.constant 0 : index
    %65 = vector.load %arg4[%c0_22, %c0_23, %c0_24] : memref<5x96x64xbf16, #tpu.memory_space<vmem>>, vector<1x96x64xbf16>
    %66 = vector.shape_cast %65 : vector<1x96x64xbf16> to vector<96x64xbf16>
    %cst_25 = arith.constant dense<0.000000e+00> : vector<64x64xf32>
    %67 = tpu.matmul %64, %66, %cst_25 {dimension_numbers = #tpu.dot_dimension_numbers<[1], [0], [0], [1], [0, 0, 1, 1], [], []>} : vector<64x96xbf16>, vector<96x64xbf16>, vector<64x64xf32> -> vector<64x64xf32>
    %68 = arith.addf %61, %67 : vector<64x64xf32>
    %69 = vector.extract_strided_slice %60 {offsets = [1, 0, 0], sizes = [8, 8, 96], strides = [1, 1, 1]} : vector<12x8x96xf32> to vector<8x8x96xf32>
    %70 = vector.shape_cast %69 : vector<8x8x96xf32> to vector<64x96xf32>
    %71 = arith.truncf %70 : vector<64x96xf32> to vector<64x96xbf16>
    %c1_26 = arith.constant 1 : index
    %c0_27 = arith.constant 0 : index
    %c0_28 = arith.constant 0 : index
    %72 = vector.load %arg4[%c1_26, %c0_27, %c0_28] : memref<5x96x64xbf16, #tpu.memory_space<vmem>>, vector<1x96x64xbf16>
    %73 = vector.shape_cast %72 : vector<1x96x64xbf16> to vector<96x64xbf16>
    %cst_29 = arith.constant dense<0.000000e+00> : vector<64x64xf32>
    %74 = tpu.matmul %71, %73, %cst_29 {dimension_numbers = #tpu.dot_dimension_numbers<[1], [0], [0], [1], [0, 0, 1, 1], [], []>} : vector<64x96xbf16>, vector<96x64xbf16>, vector<64x64xf32> -> vector<64x64xf32>
    %75 = arith.addf %68, %74 : vector<64x64xf32>
    %76 = vector.extract_strided_slice %60 {offsets = [2, 0, 0], sizes = [8, 8, 96], strides = [1, 1, 1]} : vector<12x8x96xf32> to vector<8x8x96xf32>
    %77 = vector.shape_cast %76 : vector<8x8x96xf32> to vector<64x96xf32>
    %78 = arith.truncf %77 : vector<64x96xf32> to vector<64x96xbf16>
    %c2_30 = arith.constant 2 : index
    %c0_31 = arith.constant 0 : index
    %c0_32 = arith.constant 0 : index
    %79 = vector.load %arg4[%c2_30, %c0_31, %c0_32] : memref<5x96x64xbf16, #tpu.memory_space<vmem>>, vector<1x96x64xbf16>
    %80 = vector.shape_cast %79 : vector<1x96x64xbf16> to vector<96x64xbf16>
    %cst_33 = arith.constant dense<0.000000e+00> : vector<64x64xf32>
    %81 = tpu.matmul %78, %80, %cst_33 {dimension_numbers = #tpu.dot_dimension_numbers<[1], [0], [0], [1], [0, 0, 1, 1], [], []>} : vector<64x96xbf16>, vector<96x64xbf16>, vector<64x64xf32> -> vector<64x64xf32>
    %82 = arith.addf %75, %81 : vector<64x64xf32>
    %83 = vector.extract_strided_slice %60 {offsets = [3, 0, 0], sizes = [8, 8, 96], strides = [1, 1, 1]} : vector<12x8x96xf32> to vector<8x8x96xf32>
    %84 = vector.shape_cast %83 : vector<8x8x96xf32> to vector<64x96xf32>
    %85 = arith.truncf %84 : vector<64x96xf32> to vector<64x96xbf16>
    %c3_34 = arith.constant 3 : index
    %c0_35 = arith.constant 0 : index
    %c0_36 = arith.constant 0 : index
    %86 = vector.load %arg4[%c3_34, %c0_35, %c0_36] : memref<5x96x64xbf16, #tpu.memory_space<vmem>>, vector<1x96x64xbf16>
    %87 = vector.shape_cast %86 : vector<1x96x64xbf16> to vector<96x64xbf16>
    %cst_37 = arith.constant dense<0.000000e+00> : vector<64x64xf32>
    %88 = tpu.matmul %85, %87, %cst_37 {dimension_numbers = #tpu.dot_dimension_numbers<[1], [0], [0], [1], [0, 0, 1, 1], [], []>} : vector<64x96xbf16>, vector<96x64xbf16>, vector<64x64xf32> -> vector<64x64xf32>
    %89 = arith.addf %82, %88 : vector<64x64xf32>
    %90 = vector.extract_strided_slice %60 {offsets = [4, 0, 0], sizes = [8, 8, 96], strides = [1, 1, 1]} : vector<12x8x96xf32> to vector<8x8x96xf32>
    %91 = vector.shape_cast %90 : vector<8x8x96xf32> to vector<64x96xf32>
    %92 = arith.truncf %91 : vector<64x96xf32> to vector<64x96xbf16>
    %c4_38 = arith.constant 4 : index
    %c0_39 = arith.constant 0 : index
    %c0_40 = arith.constant 0 : index
    %93 = vector.load %arg4[%c4_38, %c0_39, %c0_40] : memref<5x96x64xbf16, #tpu.memory_space<vmem>>, vector<1x96x64xbf16>
    %94 = vector.shape_cast %93 : vector<1x96x64xbf16> to vector<96x64xbf16>
    %cst_41 = arith.constant dense<0.000000e+00> : vector<64x64xf32>
    %95 = tpu.matmul %92, %94, %cst_41 {dimension_numbers = #tpu.dot_dimension_numbers<[1], [0], [0], [1], [0, 0, 1, 1], [], []>} : vector<64x96xbf16>, vector<96x64xbf16>, vector<64x64xf32> -> vector<64x64xf32>
    %96 = arith.addf %89, %95 : vector<64x64xf32>
    %c0_42 = arith.constant 0 : index
    %c0_43 = arith.constant 0 : index
    %97 = vector.load %arg5[%c0_42, %c0_43] : memref<1x64xf32, #tpu.memory_space<vmem>>, vector<1x64xf32>
    %98 = vector.broadcast %97 : vector<1x64xf32> to vector<64x64xf32>
    %99 = arith.addf %96, %98 : vector<64x64xf32>
    %cst_44 = arith.constant 0.000000e+00 : f32
    %100 = vector.broadcast %cst_44 : f32 to vector<64x64xf32>
    %101 = arith.maximumf %99, %100 : vector<64x64xf32>
    %102 = vector.shape_cast %101 : vector<64x64xf32> to vector<8x8x64xf32>
    %103 = vector.extract_strided_slice %102 {offsets = [0, 0, 0], sizes = [8, 8, 32], strides = [1, 1, 1]} : vector<8x8x64xf32> to vector<8x8x32xf32>
    %104 = vector.extract_strided_slice %102 {offsets = [0, 0, 8], sizes = [8, 8, 32], strides = [1, 1, 1]} : vector<8x8x64xf32> to vector<8x8x32xf32>
    %105 = arith.maximumf %103, %104 : vector<8x8x32xf32>
    %106 = vector.extract_strided_slice %102 {offsets = [0, 0, 16], sizes = [8, 8, 32], strides = [1, 1, 1]} : vector<8x8x64xf32> to vector<8x8x32xf32>
    %107 = arith.maximumf %105, %106 : vector<8x8x32xf32>
    %108 = vector.extract_strided_slice %102 {offsets = [0, 0, 24], sizes = [8, 8, 32], strides = [1, 1, 1]} : vector<8x8x64xf32> to vector<8x8x32xf32>
    %109 = arith.maximumf %107, %108 : vector<8x8x32xf32>
    %110 = vector.extract_strided_slice %102 {offsets = [0, 0, 32], sizes = [8, 8, 32], strides = [1, 1, 1]} : vector<8x8x64xf32> to vector<8x8x32xf32>
    %111 = arith.maximumf %109, %110 : vector<8x8x32xf32>
    %112 = vector.extract_strided_slice %111 {offsets = [0, 0, 0], sizes = [4, 8, 32], strides = [1, 1, 1]} : vector<8x8x32xf32> to vector<4x8x32xf32>
    %113 = vector.extract_strided_slice %111 {offsets = [1, 0, 0], sizes = [4, 8, 32], strides = [1, 1, 1]} : vector<8x8x32xf32> to vector<4x8x32xf32>
    %114 = arith.maximumf %112, %113 : vector<4x8x32xf32>
    %115 = vector.extract_strided_slice %111 {offsets = [2, 0, 0], sizes = [4, 8, 32], strides = [1, 1, 1]} : vector<8x8x32xf32> to vector<4x8x32xf32>
    %116 = arith.maximumf %114, %115 : vector<4x8x32xf32>
    %117 = vector.extract_strided_slice %111 {offsets = [3, 0, 0], sizes = [4, 8, 32], strides = [1, 1, 1]} : vector<8x8x32xf32> to vector<4x8x32xf32>
    %118 = arith.maximumf %116, %117 : vector<4x8x32xf32>
    %119 = vector.extract_strided_slice %111 {offsets = [4, 0, 0], sizes = [4, 8, 32], strides = [1, 1, 1]} : vector<8x8x32xf32> to vector<4x8x32xf32>
    %120 = arith.maximumf %118, %119 : vector<4x8x32xf32>
    %cst_45 = arith.constant 0.000000e+00 : f32
    %121 = vector.broadcast %cst_45 : f32 to vector<8x8xf32>
    %122 = vector.extract_strided_slice %120 {offsets = [0, 0, 0], sizes = [1, 8, 32], strides = [1, 1, 1]} : vector<4x8x32xf32> to vector<1x8x32xf32>
    %123 = vector.shape_cast %122 : vector<1x8x32xf32> to vector<8x32xf32>
    %124 = arith.truncf %123 : vector<8x32xf32> to vector<8x32xbf16>
    %c0_46 = arith.constant 0 : index
    %c0_47 = arith.constant 0 : index
    %c0_48 = arith.constant 0 : index
    %125 = vector.load %arg6[%c0_46, %c0_47, %c0_48] : memref<4x32x8xbf16, #tpu.memory_space<vmem>>, vector<1x32x8xbf16>
    %126 = vector.shape_cast %125 : vector<1x32x8xbf16> to vector<32x8xbf16>
    %cst_49 = arith.constant dense<0.000000e+00> : vector<8x8xf32>
    %127 = tpu.matmul %124, %126, %cst_49 {dimension_numbers = #tpu.dot_dimension_numbers<[1], [0], [0], [1], [0, 0, 1, 1], [], []>} : vector<8x32xbf16>, vector<32x8xbf16>, vector<8x8xf32> -> vector<8x8xf32>
    %128 = arith.addf %121, %127 : vector<8x8xf32>
    %129 = vector.extract_strided_slice %120 {offsets = [1, 0, 0], sizes = [1, 8, 32], strides = [1, 1, 1]} : vector<4x8x32xf32> to vector<1x8x32xf32>
    %130 = vector.shape_cast %129 : vector<1x8x32xf32> to vector<8x32xf32>
    %131 = arith.truncf %130 : vector<8x32xf32> to vector<8x32xbf16>
    %c1_50 = arith.constant 1 : index
    %c0_51 = arith.constant 0 : index
    %c0_52 = arith.constant 0 : index
    %132 = vector.load %arg6[%c1_50, %c0_51, %c0_52] : memref<4x32x8xbf16, #tpu.memory_space<vmem>>, vector<1x32x8xbf16>
    %133 = vector.shape_cast %132 : vector<1x32x8xbf16> to vector<32x8xbf16>
    %cst_53 = arith.constant dense<0.000000e+00> : vector<8x8xf32>
    %134 = tpu.matmul %131, %133, %cst_53 {dimension_numbers = #tpu.dot_dimension_numbers<[1], [0], [0], [1], [0, 0, 1, 1], [], []>} : vector<8x32xbf16>, vector<32x8xbf16>, vector<8x8xf32> -> vector<8x8xf32>
    %135 = arith.addf %128, %134 : vector<8x8xf32>
    %136 = vector.extract_strided_slice %120 {offsets = [2, 0, 0], sizes = [1, 8, 32], strides = [1, 1, 1]} : vector<4x8x32xf32> to vector<1x8x32xf32>
    %137 = vector.shape_cast %136 : vector<1x8x32xf32> to vector<8x32xf32>
    %138 = arith.truncf %137 : vector<8x32xf32> to vector<8x32xbf16>
    %c2_54 = arith.constant 2 : index
    %c0_55 = arith.constant 0 : index
    %c0_56 = arith.constant 0 : index
    %139 = vector.load %arg6[%c2_54, %c0_55, %c0_56] : memref<4x32x8xbf16, #tpu.memory_space<vmem>>, vector<1x32x8xbf16>
    %140 = vector.shape_cast %139 : vector<1x32x8xbf16> to vector<32x8xbf16>
    %cst_57 = arith.constant dense<0.000000e+00> : vector<8x8xf32>
    %141 = tpu.matmul %138, %140, %cst_57 {dimension_numbers = #tpu.dot_dimension_numbers<[1], [0], [0], [1], [0, 0, 1, 1], [], []>} : vector<8x32xbf16>, vector<32x8xbf16>, vector<8x8xf32> -> vector<8x8xf32>
    %142 = arith.addf %135, %141 : vector<8x8xf32>
    %143 = vector.extract_strided_slice %120 {offsets = [3, 0, 0], sizes = [1, 8, 32], strides = [1, 1, 1]} : vector<4x8x32xf32> to vector<1x8x32xf32>
    %144 = vector.shape_cast %143 : vector<1x8x32xf32> to vector<8x32xf32>
    %145 = arith.truncf %144 : vector<8x32xf32> to vector<8x32xbf16>
    %c3_58 = arith.constant 3 : index
    %c0_59 = arith.constant 0 : index
    %c0_60 = arith.constant 0 : index
    %146 = vector.load %arg6[%c3_58, %c0_59, %c0_60] : memref<4x32x8xbf16, #tpu.memory_space<vmem>>, vector<1x32x8xbf16>
    %147 = vector.shape_cast %146 : vector<1x32x8xbf16> to vector<32x8xbf16>
    %cst_61 = arith.constant dense<0.000000e+00> : vector<8x8xf32>
    %148 = tpu.matmul %145, %147, %cst_61 {dimension_numbers = #tpu.dot_dimension_numbers<[1], [0], [0], [1], [0, 0, 1, 1], [], []>} : vector<8x32xbf16>, vector<32x8xbf16>, vector<8x8xf32> -> vector<8x8xf32>
    %149 = arith.addf %142, %148 : vector<8x8xf32>
    %c0_62 = arith.constant 0 : index
    %c0_63 = arith.constant 0 : index
    %150 = vector.load %arg7[%c0_62, %c0_63] : memref<1x8xf32, #tpu.memory_space<vmem>>, vector<1x8xf32>
    %151 = vector.broadcast %150 : vector<1x8xf32> to vector<8x8xf32>
    %152 = arith.addf %149, %151 : vector<8x8xf32>
    %c0_64 = arith.constant 0 : index
    %c0_65 = arith.constant 0 : index
    %153 = vector.load %arg8[%c0_64, %c0_65] : memref<8x8xf32, #tpu.memory_space<vmem>>, vector<8x8xf32>
    tpu.vector_store %arg8[%c0_64, %c0_65], %152 {strides = array<i32>} : memref<8x8xf32, #tpu.memory_space<vmem>>, vector<8x8xf32>,
    return
  }
  func.func @transform_0(%arg0: i32) -> (i32, i32, i32) {
    %c0_i32 = arith.constant 0 : i32
    %c0_i32_0 = arith.constant 0 : i32
    %c0_i32_1 = arith.constant 0 : i32
    return %c0_i32, %arg0, %c0_i32_0 : i32, i32, i32
  }
  func.func @transform_1(%arg0: i32) -> (i32, i32, i32) {
    %c0_i32 = arith.constant 0 : i32
    %c0_i32_0 = arith.constant 0 : i32
    %c0_i32_1 = arith.constant 0 : i32
    %c0_i32_2 = arith.constant 0 : i32
    return %c0_i32, %c0_i32_0, %c0_i32_1 : i32, i32, i32
  }
  func.func @transform_2(%arg0: i32) -> (i32, i32) {
    %c0_i32 = arith.constant 0 : i32
    %c0_i32_0 = arith.constant 0 : i32
    %c0_i32_1 = arith.constant 0 : i32
    return %c0_i32, %c0_i32_0 : i32, i32
  }
  func.func @transform_3(%arg0: i32) -> (i32, i32, i32) {
    %c0_i32 = arith.constant 0 : i32
    %c0_i32_0 = arith.constant 0 : i32
    %c0_i32_1 = arith.constant 0 : i32
    %c0_i32_2 = arith.constant 0 : i32
    return %c0_i32, %c0_i32_0, %c0_i32_1 : i32, i32, i32
  }
  func.func @transform_4(%arg0: i32) -> (i32, i32) {
    %c0_i32 = arith.constant 0 : i32
    %c0_i32_0 = arith.constant 0 : i32
    %c0_i32_1 = arith.constant 0 : i32
    return %c0_i32, %c0_i32_0 : i32, i32
  }
  func.func @transform_5(%arg0: i32) -> (i32, i32, i32) {
    %c0_i32 = arith.constant 0 : i32
    %c0_i32_0 = arith.constant 0 : i32
    %c0_i32_1 = arith.constant 0 : i32
    %c0_i32_2 = arith.constant 0 : i32
    return %c0_i32, %c0_i32_0, %c0_i32_1 : i32, i32, i32
  }
  func.func @transform_6(%arg0: i32) -> (i32, i32) {
    %c0_i32 = arith.constant 0 : i32
    %c0_i32_0 = arith.constant 0 : i32
    %c0_i32_1 = arith.constant 0 : i32
    return %c0_i32, %c0_i32_0 : i32, i32
  }
  func.func @transform_7(%arg0: i32) -> (i32, i32) {
    %c0_i32 = arith.constant 0 : i32
    %c0_i32_0 = arith.constant 0 : i32
    return %arg0, %c0_i32 : i32, i32
  }
}

</mosaic_0001>

<llo_original>
// kernel: tpu_custom_call.1
$region0: #{tpu_custom_call.1}
  #allocation0 [shape = 'u32[]', space=smem, size = 0x4, offset = 0x4, fixed_abs, tag = 'smem constant byte address 0x4 - core index']
  #allocation1 [shape = 'u32[72,128]{1,0:T(1,128)}', space=vmem, size = 0x9000, scoped, tag = 'internal scratch']
  %s0 = inlined_call_operand.vmem [shape: f32[20,16,80], index: 0, kind: input, shape index: {}]
  %s1 = inlined_call_operand.hbm [shape: bf16[5,80,128], index: 1, kind: input, shape index: {}]
  %s2 = inlined_call_operand.vmem [shape: f32[1,128], index: 2, kind: input, shape index: {}]
  %s3 = inlined_call_operand.vmem [shape: bf16[5,96,64], index: 3, kind: input, shape index: {}]
  %s4 = inlined_call_operand.vmem [shape: f32[1,64], index: 4, kind: input, shape index: {}]
  %s5 = inlined_call_operand.vmem [shape: bf16[4,32,8], index: 5, kind: input, shape index: {}]
  %s6 = inlined_call_operand.vmem [shape: f32[1,8], index: 6, kind: input, shape index: {}]
  %s7 = inlined_call_operand.vmem [shape: f32[16,8], index: 7, kind: output, shape index: {}]
  %s8 = sld [smem:[#allocation0]]
  $region103: #{tpu_custom_call.1} parent=0
    _
  %s10 = ssub.s32 1, %s8
  %s11 = scalar_select 0, %s10, %s8
  $region1: #{tpu_custom_call.1} parent=0
    #allocation2 [shape = 'u8[163840]{0}', space=vmem, size = 0x28000, scoped, tag = 'input window, operand 0']
    #allocation3 [shape = 'u8[102400]{0}', space=vmem, size = 0x19000, scoped, tag = 'input window, operand 1, single buffered']
    #allocation4 [shape = 's32[2]{0}', space=sflag, size = 0x8, scoped, tag = 'scoped memory for tpu_custom_call.1']
    %12 = vsyncpa [#allocation4], 0
    loop: start=0, step=1, limit=4
    $region2: #{tpu_custom_call.1} parent=1 // loop_pre_header
      _
    $region3: #{tpu_custom_call.1} parent=1 // loop_header
      %s14 = sphi 0, %s18
      %p15 = scmp.ge.s32.totalorder %s14, 4
      %s24 = sphi 0, %s26
      %s27 = sphi 0, %s24
      %s28 = sphi 0, %s27
      %s44 = sphi 0, %s28
      %s48 = sphi 0, %s48
      %s50 = sphi 0, %s48
      %s51 = sphi 0, %s50
      %s65 = sphi 0, %s51
      %s69 = sphi 0, %s69
      %s71 = sphi 0, %s69
      %s72 = sphi 0, %s71
      %s86 = sphi 0, %s72
      %s90 = sphi 0, %s90
      %s92 = sphi 0, %s90
      %s93 = sphi 0, %s92
      %s107 = sphi 0, %s93
      %s111 = sphi 0, %s111
      %s113 = sphi 0, %s111
      %s114 = sphi 0, %s113
      %s128 = sphi 0, %s114
      %s132 = sphi 0, %s132
      %s134 = sphi 0, %s132
      %s135 = sphi 0, %s134
      %s149 = sphi 0, %s135
      %s153 = sphi 0, %s153
      %s155 = sphi 0, %s153
      %s156 = sphi 0, %s155
      %s170 = sphi 0, %s156
      %s176 = sphi 0, %s178
      %s179 = sphi 0, %s176
      %s180 = sphi 0, %s179
      %s196 = sphi 0, %s180
    $region4: #{tpu_custom_call.1} parent=1 // loop_header_branch
      %17 = sbr.rel (%p15) target = $region8
    $region5: #{tpu_custom_call.1} parent=1 // loop_body
      %s19 = ssub.s32 %s14, 1
      %s20 = ssub.s32 %s14, 2
      %s21 = sadd.s32 %s14, 1
      %s22 = ssub.s32 %s14, %s21
      %p23 = scmp.eq.s32.totalorder %s22, 0
      %s25 = sadd.s32 %s24, 1
      %s26 = scalar_select %p23, %s24, %s25
      %p29 = pneg %p23
      %p30 = scmp.eq.s32.totalorder %s14, 1
      %p31 = por %p29, %p30
      %p32 = scmp.ne.s32.totalorder %s24, %s27
      %p33 = scmp.eq.s32.totalorder %s14, 0
      %p34 = por %p32, %p33
      %p35 = scmp.ne.s32.totalorder %s24, %s27
      %p36 = scmp.eq.s32.totalorder %s19, 1
      %p37 = por %p35, %p36
      %p38 = scmp.ne.s32.totalorder %s27, %s28
      %p39 = scmp.eq.s32.totalorder %s19, 0
      %p40 = por %p38, %p39
      %p41 = scmp.ne.s32.totalorder %s27, %s28
      %p42 = scmp.eq.s32.totalorder %s20, 1
      %p43 = por %p41, %p42
      %p45 = scmp.ne.s32.totalorder %s28, %s44
      %p46 = scmp.eq.s32.totalorder %s20, 0
      %p47 = por %p45, %p46
      %s49 = sadd.s32 %s48, 1
      %p52 = scmp.eq.s32.totalorder %s14, 1
      %p53 = scmp.ne.s32.totalorder %s48, %s50
      %p54 = scmp.eq.s32.totalorder %s14, 0
      %p55 = por %p53, %p54
      %p56 = scmp.ne.s32.totalorder %s48, %s50
      %p57 = scmp.eq.s32.totalorder %s19, 1
      %p58 = por %p56, %p57
      %p59 = scmp.ne.s32.totalorder %s50, %s51
      %p60 = scmp.eq.s32.totalorder %s19, 0
      %p61 = por %p59, %p60
      %p62 = scmp.ne.s32.totalorder %s50, %s51
      %p63 = scmp.eq.s32.totalorder %s20, 1
      %p64 = por %p62, %p63
      %p66 = scmp.ne.s32.totalorder %s51, %s65
      %p67 = scmp.eq.s32.totalorder %s20, 0
      %p68 = por %p66, %p67
      %s70 = sadd.s32 %s69, 1
      %p73 = scmp.eq.s32.totalorder %s14, 1
      %p74 = scmp.ne.s32.totalorder %s69, %s71
      %p75 = scmp.eq.s32.totalorder %s14, 0
      %p76 = por %p74, %p75
      %p77 = scmp.ne.s32.totalorder %s69, %s71
      %p78 = scmp.eq.s32.totalorder %s19, 1
      %p79 = por %p77, %p78
      %p80 = scmp.ne.s32.totalorder %s71, %s72
      %p81 = scmp.eq.s32.totalorder %s19, 0
      %p82 = por %p80, %p81
      %p83 = scmp.ne.s32.totalorder %s71, %s72
      %p84 = scmp.eq.s32.totalorder %s20, 1
      %p85 = por %p83, %p84
      %p87 = scmp.ne.s32.totalorder %s72, %s86
      %p88 = scmp.eq.s32.totalorder %s20, 0
      %p89 = por %p87, %p88
      %s91 = sadd.s32 %s90, 1
      %p94 = scmp.eq.s32.totalorder %s14, 1
      %p95 = scmp.ne.s32.totalorder %s90, %s92
      %p96 = scmp.eq.s32.totalorder %s14, 0
      %p97 = por %p95, %p96
      %p98 = scmp.ne.s32.totalorder %s90, %s92
      %p99 = scmp.eq.s32.totalorder %s19, 1
      %p100 = por %p98, %p99
      %p101 = scmp.ne.s32.totalorder %s92, %s93
      %p102 = scmp.eq.s32.totalorder %s19, 0
      %p103 = por %p101, %p102
      %p104 = scmp.ne.s32.totalorder %s92, %s93
      %p105 = scmp.eq.s32.totalorder %s20, 1
      %p106 = por %p104, %p105
      %p108 = scmp.ne.s32.totalorder %s93, %s107
      %p109 = scmp.eq.s32.totalorder %s20, 0
      %p110 = por %p108, %p109
      %s112 = sadd.s32 %s111, 1
      %p115 = scmp.eq.s32.totalorder %s14, 1
      %p116 = scmp.ne.s32.totalorder %s111, %s113
      %p117 = scmp.eq.s32.totalorder %s14, 0
      %p118 = por %p116, %p117
      %p119 = scmp.ne.s32.totalorder %s111, %s113
      %p120 = scmp.eq.s32.totalorder %s19, 1
      %p121 = por %p119, %p120
      %p122 = scmp.ne.s32.totalorder %s113, %s114
      %p123 = scmp.eq.s32.totalorder %s19, 0
      %p124 = por %p122, %p123
      %p125 = scmp.ne.s32.totalorder %s113, %s114
      %p126 = scmp.eq.s32.totalorder %s20, 1
      %p127 = por %p125, %p126
      %p129 = scmp.ne.s32.totalorder %s114, %s128
      %p130 = scmp.eq.s32.totalorder %s20, 0
      %p131 = por %p129, %p130
      %s133 = sadd.s32 %s132, 1
      %p136 = scmp.eq.s32.totalorder %s14, 1
      %p137 = scmp.ne.s32.totalorder %s132, %s134
      %p138 = scmp.eq.s32.totalorder %s14, 0
      %p139 = por %p137, %p138
      %p140 = scmp.ne.s32.totalorder %s132, %s134
      %p141 = scmp.eq.s32.totalorder %s19, 1
      %p142 = por %p140, %p141
      %p143 = scmp.ne.s32.totalorder %s134, %s135
      %p144 = scmp.eq.s32.totalorder %s19, 0
      %p145 = por %p143, %p144
      %p146 = scmp.ne.s32.totalorder %s134, %s135
      %p147 = scmp.eq.s32.totalorder %s20, 1
      %p148 = por %p146, %p147
      %p150 = scmp.ne.s32.totalorder %s135, %s149
      %p151 = scmp.eq.s32.totalorder %s20, 0
      %p152 = por %p150, %p151
      %s154 = sadd.s32 %s153, 1
      %p157 = scmp.eq.s32.totalorder %s14, 1
      %p158 = scmp.ne.s32.totalorder %s153, %s155
      %p159 = scmp.eq.s32.totalorder %s14, 0
      %p160 = por %p158, %p159
      %p161 = scmp.ne.s32.totalorder %s153, %s155
      %p162 = scmp.eq.s32.totalorder %s19, 1
      %p163 = por %p161, %p162
      %p164 = scmp.ne.s32.totalorder %s155, %s156
      %p165 = scmp.eq.s32.totalorder %s19, 0
      %p166 = por %p164, %p165
      %p167 = scmp.ne.s32.totalorder %s155, %s156
      %p168 = scmp.eq.s32.totalorder %s20, 1
      %p169 = por %p167, %p168
      %p171 = scmp.ne.s32.totalorder %s156, %s170
      %p172 = scmp.eq.s32.totalorder %s20, 0
      %p173 = por %p171, %p172
      %s174 = ssub.s32 %s14, %s21
      %p175 = scmp.eq.s32.totalorder %s174, 0
      %s177 = sadd.s32 %s176, 1
      %s178 = scalar_select %p175, %s176, %s177
      %p181 = pneg %p175
      %p182 = scmp.eq.s32.totalorder %s14, 1
      %p183 = por %p181, %p182
      %p184 = scmp.ne.s32.totalorder %s176, %s179
      %p185 = scmp.eq.s32.totalorder %s14, 0
      %p186 = por %p184, %p185
      %p187 = scmp.ne.s32.totalorder %s176, %s179
      %p188 = scmp.eq.s32.totalorder %s19, 1
      %p189 = por %p187, %p188
      %p190 = scmp.ne.s32.totalorder %s179, %s180
      %p191 = scmp.eq.s32.totalorder %s19, 0
      %p192 = por %p190, %p191
      %p193 = scmp.ne.s32.totalorder %s179, %s180
      %p194 = scmp.eq.s32.totalorder %s20, 1
      %p195 = por %p193, %p194
      %p197 = scmp.ne.s32.totalorder %s180, %s196
      %p198 = scmp.eq.s32.totalorder %s20, 0
      %p199 = por %p197, %p198
      %p200 = scmp.le.s32.totalorder 1, %s14
      %p201 = scmp.lt.s32.totalorder %s14, 3
      %p202 = pnand %p200, %p201
      %p203 = pneg %p202
      // Predicated region
      $region9: #{tpu_custom_call.1} parent=5 // pred_check
        _
      $region10: #{tpu_custom_call.1} parent=5 // pred_check_branch
        %205 = sbr.rel (%p202) target = $region12
      $region11: #{tpu_custom_call.1} parent=5 // pred_region
        %s206 = ssub.s32 %s14, 1
        // Predicated region
        $region13: #{tpu_custom_call.1} parent=11 // pred_check
          %p207 = pneg %p61
        $region14: #{tpu_custom_call.1} parent=11 // pred_check_branch
          %209 = sbr.rel (%p207) target = $region16
        $region15: #{tpu_custom_call.1} parent=11 // pred_region
          %211 = vsyncadd [#allocation4], 0
          %s212 = sshll.u32 %s1, 4
          %s213 = int_to_ptr.hbm [resolvable:$true] %s212
          %s214 = sshll.u32 [#allocation3], 4
          %s215 = int_to_ptr.vmem [resolvable:$true] %s214
          %220 = dma.hbm_to_vmem [thread:$0]  %s213, 3200, %s215, [#allocation4], 64, 64, 4
        $region16: #{tpu_custom_call.1} parent=11 // pred_fallthru
          _
        // Predicated region
        $region17: #{tpu_custom_call.1} parent=11 // pred_check
          %p221 = pneg %p82
        $region18: #{tpu_custom_call.1} parent=11 // pred_check_branch
          %223 = sbr.rel (%p221) target = $region20
        $region19: #{tpu_custom_call.1} parent=11 // pred_region
          _
        $region20: #{tpu_custom_call.1} parent=11 // pred_fallthru
          _
        // Predicated region
        $region21: #{tpu_custom_call.1} parent=11 // pred_check
          %p224 = pneg %p103
        $region22: #{tpu_custom_call.1} parent=11 // pred_check_branch
          %226 = sbr.rel (%p224) target = $region24
        $region23: #{tpu_custom_call.1} parent=11 // pred_region
          _
        $region24: #{tpu_custom_call.1} parent=11 // pred_fallthru
          _
        // Predicated region
        $region25: #{tpu_custom_call.1} parent=11 // pred_check
          %p227 = pneg %p124
        $region26: #{tpu_custom_call.1} parent=11 // pred_check_branch
          %229 = sbr.rel (%p227) target = $region28
        $region27: #{tpu_custom_call.1} parent=11 // pred_region
          _
        $region28: #{tpu_custom_call.1} parent=11 // pred_fallthru
          _
        // Predicated region
        $region29: #{tpu_custom_call.1} parent=11 // pred_check
          %p230 = pneg %p145
        $region30: #{tpu_custom_call.1} parent=11 // pred_check_branch
          %232 = sbr.rel (%p230) target = $region32
        $region31: #{tpu_custom_call.1} parent=11 // pred_region
          _
        $region32: #{tpu_custom_call.1} parent=11 // pred_fallthru
          _
        // Predicated region
        $region33: #{tpu_custom_call.1} parent=11 // pred_check
          %p233 = pneg %p166
        $region34: #{tpu_custom_call.1} parent=11 // pred_check_branch
          %235 = sbr.rel (%p233) target = $region36
        $region35: #{tpu_custom_call.1} parent=11 // pred_region
          _
        $region36: #{tpu_custom_call.1} parent=11 // pred_fallthru
          _
      $region12: #{tpu_custom_call.1} parent=5 // pred_fallthru
        _
      %p236 = scmp.lt.s32.totalorder %s14, 2
      // Predicated region
      $region37: #{tpu_custom_call.1} parent=5 // pred_check
        %p237 = pneg %p236
      $region38: #{tpu_custom_call.1} parent=5 // pred_check_branch
        %239 = sbr.rel (%p237) target = $region40
      $region39: #{tpu_custom_call.1} parent=5 // pred_region
        // Predicated region
        $region41: #{tpu_custom_call.1} parent=39 // pred_check
          %p240 = pneg %p34
        $region42: #{tpu_custom_call.1} parent=39 // pred_check_branch
          %242 = sbr.rel (%p240) target = $region44
        $region43: #{tpu_custom_call.1} parent=39 // pred_region
          %s243 = sand.u32 %s24, 1
          %s244 = sand.u32 %s24, 1
          %s245 = smul.addr %s244, 160
          %s246 = scalar_lea.vmem [#allocation2], %s245
          %s247 = smul.addr %s14, 8
          %s248 = scalar_lea.vmem %s0, %s247
          // Predicated region
          $region45: #{tpu_custom_call.1} parent=43 // pred_check
            _
          $region46: #{tpu_custom_call.1} parent=43 // pred_check_branch
            %250 = sbr.rel (0) target = $region48
          $region47: #{tpu_custom_call.1} parent=43 // pred_region
            // Predicated region
            $region49: #{tpu_custom_call.1} parent=47 // pred_check
              _
            $region50: #{tpu_custom_call.1} parent=47 // pred_check_branch
              %252 = sbr.rel (0) target = $region52
            $region51: #{tpu_custom_call.1} parent=47 // pred_region
              // Predicated region
              $region64: #{tpu_custom_call.1} parent=51 // pred_check
                _
              $region65: #{tpu_custom_call.1} parent=51 // pred_check_branch
                %306 = sbr.rel (0) target = $region67
              $region66: #{tpu_custom_call.1} parent=51 // pred_region
                loop: start=0, step=1, limit=1
                $region68: #{tpu_custom_call.1} parent=66 // loop_pre_header
                  _
                $region69: #{tpu_custom_call.1} parent=66 // loop_header
                  %s308 = sphi 0, %s312
                  %p309 = scmp.ge.s32.totalorder %s308, 1
                  %s313 = sphi %s248, %s248
                  %s314 = sphi %s246, %s246
                $region70: #{tpu_custom_call.1} parent=66 // loop_header_branch
                  %311 = sbr.rel (%p309) target = $region74
                $region71: #{tpu_custom_call.1} parent=66 // loop_body
                  %v315 = vld [vmem:[%s313] sm:$0xff]
                  %316 = vst [vmem:[%s314] sm:$0xff] %v315
                  %v317 = vld [vmem:[%s313 + $0x10] sm:$0xff]
                  %318 = vst [vmem:[%s314 + $0x8] sm:$0xff] %v317
                  %v319 = vld [vmem:[%s313 + $0x20] sm:$0xff]
                  %320 = vst [vmem:[%s314 + $0x10] sm:$0xff] %v319
                  %v321 = vld [vmem:[%s313 + $0x30] sm:$0xff]
                  %322 = vst [vmem:[%s314 + $0x18] sm:$0xff] %v321
                  %v323 = vld [vmem:[%s313 + $0x40] sm:$0xff]
                  %324 = vst [vmem:[%s314 + $0x20] sm:$0xff] %v323
                  %v325 = vld [vmem:[%s313 + $0x50] sm:$0xff]
                  %326 = vst [vmem:[%s314 + $0x28] sm:$0xff] %v325
                  %v327 = vld [vmem:[%s313 + $0x60] sm:$0xff]
                  %328 = vst [vmem:[%s314 + $0x30] sm:$0xff] %v327
                  %v329 = vld [vmem:[%s313 + $0x70] sm:$0xff]
                  %330 = vst [vmem:[%s314 + $0x38] sm:$0xff] %v329
                  %v331 = vld [vmem:[%s313 + $0x80] sm:$0xff]
                  %332 = vst [vmem:[%s314 + $0x40] sm:$0xff] %v331
                  %v333 = vld [vmem:[%s313 + $0x90] sm:$0xff]
                  %334 = vst [vmem:[%s314 + $0x48] sm:$0xff] %v333
                  %v335 = vld [vmem:[%s313 + $0xa0] sm:$0xff]
                  %336 = vst [vmem:[%s314 + $0x50] sm:$0xff] %v335
                  %v337 = vld [vmem:[%s313 + $0xb0] sm:$0xff]
                  %338 = vst [vmem:[%s314 + $0x58] sm:$0xff] %v337
                  %v339 = vld [vmem:[%s313 + $0xc0] sm:$0xff]
                  %340 = vst [vmem:[%s314 + $0x60] sm:$0xff] %v339
                  %v341 = vld [vmem:[%s313 + $0xd0] sm:$0xff]
                  %342 = vst [vmem:[%s314 + $0x68] sm:$0xff] %v341
                  %v343 = vld [vmem:[%s313 + $0xe0] sm:$0xff]
                  %344 = vst [vmem:[%s314 + $0x70] sm:$0xff] %v343
                  %v345 = vld [vmem:[%s313 + $0xf0] sm:$0xff]
                  %346 = vst [vmem:[%s314 + $0x78] sm:$0xff] %v345
                  %v347 = vld [vmem:[%s313 + $0x100] sm:$0xff]
                  %348 = vst [vmem:[%s314 + $0x80] sm:$0xff] %v347
                  %v349 = vld [vmem:[%s313 + $0x110] sm:$0xff]
                  %350 = vst [vmem:[%s314 + $0x88] sm:$0xff] %v349
                  %v351 = vld [vmem:[%s313 + $0x120] sm:$0xff]
                  %352 = vst [vmem:[%s314 + $0x90] sm:$0xff] %v351
                  %v353 = vld [vmem:[%s313 + $0x130] sm:$0xff]
                  %354 = vst [vmem:[%s314 + $0x98] sm:$0xff] %v353
                $region72: #{tpu_custom_call.1} parent=66 // loop_footer
                  %s312 = sadd.s32 1, %s308
                $region73: #{tpu_custom_call.1} parent=66 // loop_footer_branch
                  %307 = sbr.rel target = $region69
                $region74: #{tpu_custom_call.1} parent=66 // loop_exit
                  _
              $region67: #{tpu_custom_call.1} parent=51 // pred_fallthru
                _
              // Predicated region
              $region75: #{tpu_custom_call.1} parent=51 // pred_check
                _
              $region76: #{tpu_custom_call.1} parent=51 // pred_check_branch
                %356 = sbr.rel target = $region78
              $region77: #{tpu_custom_call.1} parent=51 // pred_region
                _
              $region78: #{tpu_custom_call.1} parent=51 // pred_fallthru
                _
            $region52: #{tpu_custom_call.1} parent=47 // pred_fallthru
              _
            // Predicated region
            $region53: #{tpu_custom_call.1} parent=47 // pred_check
              _
            $region54: #{tpu_custom_call.1} parent=47 // pred_check_branch
              %254 = sbr.rel target = $region56
            $region55: #{tpu_custom_call.1} parent=47 // pred_region
              %s256 = ssub.s32 256, 1
              loop: start=0, step=1, limit=1
              $region57: #{tpu_custom_call.1} parent=55 // loop_pre_header
                _
              $region58: #{tpu_custom_call.1} parent=55 // loop_header
                %s258 = sphi 0, %s262
                %p259 = scmp.ge.s32.totalorder %s258, 1
                %s263 = sphi %s248, %s248
                %s264 = sphi %s246, %s246
              $region59: #{tpu_custom_call.1} parent=55 // loop_header_branch
                %261 = sbr.rel (%p259) target = $region63
              $region60: #{tpu_custom_call.1} parent=55 // loop_body
                %v265 = vld [vmem:[%s263] sm:%s256]
                %266 = vst [vmem:[%s264] sm:%s256] %v265
                %v267 = vld [vmem:[%s263 + $0x10] sm:%s256]
                %268 = vst [vmem:[%s264 + $0x8] sm:%s256] %v267
                %v269 = vld [vmem:[%s263 + $0x20] sm:%s256]
                %270 = vst [vmem:[%s264 + $0x10] sm:%s256] %v269
                %v271 = vld [vmem:[%s263 + $0x30] sm:%s256]
                %272 = vst [vmem:[%s264 + $0x18] sm:%s256] %v271
                %v273 = vld [vmem:[%s263 + $0x40] sm:%s256]
                %274 = vst [vmem:[%s264 + $0x20] sm:%s256] %v273
                %v275 = vld [vmem:[%s263 + $0x50] sm:%s256]
                %276 = vst [vmem:[%s264 + $0x28] sm:%s256] %v275
                %v277 = vld [vmem:[%s263 + $0x60] sm:%s256]
                %278 = vst [vmem:[%s264 + $0x30] sm:%s256] %v277
                %v279 = vld [vmem:[%s263 + $0x70] sm:%s256]
                %280 = vst [vmem:[%s264 + $0x38] sm:%s256] %v279
                %v281 = vld [vmem:[%s263 + $0x80] sm:%s256]
                %282 = vst [vmem:[%s264 + $0x40] sm:%s256] %v281
                %v283 = vld [vmem:[%s263 + $0x90] sm:%s256]
                %284 = vst [vmem:[%s264 + $0x48] sm:%s256] %v283
                %v285 = vld [vmem:[%s263 + $0xa0] sm:%s256]
                %286 = vst [vmem:[%s264 + $0x50] sm:%s256] %v285
                %v287 = vld [vmem:[%s263 + $0xb0] sm:%s256]
                %288 = vst [vmem:[%s264 + $0x58] sm:%s256] %v287
                %v289 = vld [vmem:[%s263 + $0xc0] sm:%s256]
                %290 = vst [vmem:[%s264 + $0x60] sm:%s256] %v289
                %v291 = vld [vmem:[%s263 + $0xd0] sm:%s256]
                %292 = vst [vmem:[%s264 + $0x68] sm:%s256] %v291
                %v293 = vld [vmem:[%s263 + $0xe0] sm:%s256]
                %294 = vst [vmem:[%s264 + $0x70] sm:%s256] %v293
                %v295 = vld [vmem:[%s263 + $0xf0] sm:%s256]
                %296 = vst [vmem:[%s264 + $0x78] sm:%s256] %v295
                %v297 = vld [vmem:[%s263 + $0x100] sm:%s256]
                %298 = vst [vmem:[%s264 + $0x80] sm:%s256] %v297
                %v299 = vld [vmem:[%s263 + $0x110] sm:%s256]
                %300 = vst [vmem:[%s264 + $0x88] sm:%s256] %v299
                %v301 = vld [vmem:[%s263 + $0x120] sm:%s256]
                %302 = vst [vmem:[%s264 + $0x90] sm:%s256] %v301
                %v303 = vld [vmem:[%s263 + $0x130] sm:%s256]
                %304 = vst [vmem:[%s264 + $0x98] sm:%s256] %v303
              $region61: #{tpu_custom_call.1} parent=55 // loop_footer
                %s262 = sadd.s32 1, %s258
              $region62: #{tpu_custom_call.1} parent=55 // loop_footer_branch
                %257 = sbr.rel target = $region58
              $region63: #{tpu_custom_call.1} parent=55 // loop_exit
                _
            $region56: #{tpu_custom_call.1} parent=47 // pred_fallthru
              _
          $region48: #{tpu_custom_call.1} parent=43 // pred_fallthru
            _
          %357 = vnop
        $region44: #{tpu_custom_call.1} parent=39 // pred_fallthru
          _
      $region40: #{tpu_custom_call.1} parent=5 // pred_fallthru
        _
      %p358 = scmp.le.s32.totalorder 1, %s14
      %p359 = scmp.lt.s32.totalorder %s14, 3
      %p360 = pnand %p358, %p359
      %p361 = pneg %p360
      // Predicated region
      $region79: #{tpu_custom_call.1} parent=5 // pred_check
        _
      $region80: #{tpu_custom_call.1} parent=5 // pred_check_branch
        %363 = sbr.rel (%p360) target = $region82
      $region81: #{tpu_custom_call.1} parent=5 // pred_region
        %s364 = ssub.s32 %s14, 1
        %s365 = sand.u32 %s27, 1
        %s366 = sand.u32 %s27, 1
        %s367 = smul.addr %s366, 160
        %s368 = scalar_lea.vmem [#allocation2], %s367
        // Predicated region
        $region83: #{tpu_custom_call.1} parent=81 // pred_check
          %p369 = pneg %p40
        $region84: #{tpu_custom_call.1} parent=81 // pred_check_branch
          %371 = sbr.rel (%p369) target = $region86
        $region85: #{tpu_custom_call.1} parent=81 // pred_region
          _
        $region86: #{tpu_custom_call.1} parent=81 // pred_fallthru
          _
        // Predicated region
        $region87: #{tpu_custom_call.1} parent=81 // pred_check
          %p372 = pneg %p61
        $region88: #{tpu_custom_call.1} parent=81 // pred_check_branch
          %374 = sbr.rel (%p372) target = $region90
        $region89: #{tpu_custom_call.1} parent=81 // pred_region
          %376 = dma.done [#allocation4], 3200
        $region90: #{tpu_custom_call.1} parent=81 // pred_fallthru
          _
        %s377 = sand.u32 %s27, 1
        %s378 = sand.u32 %s27, 1
        %s379 = smul.addr %s378, 160
        %s380 = scalar_lea.vmem [#allocation2], %s379
        %p381 = pneg %p40
        %p382 = pneg %p37
        %p383 = pneg %p61
        %p384 = pneg %p58
        %p385 = pneg %p82
        %p386 = pneg %p79
        %p387 = pneg %p103
        %p388 = pneg %p100
        %p389 = pneg %p124
        %p390 = pneg %p121
        %p391 = pneg %p145
        %p392 = pneg %p142
        %p393 = pneg %p166
        %p394 = pneg %p163
        %p395 = pneg %p192
        %p396 = pneg %p189
        %p397 = scmp.lt.s32.totalorder %s19, 1
        %s398 = scalar_select %p397, %s19, 1
        %s399 = smul.addr %s398, 8
        %s400 = scalar_lea.vmem %s7, %s399
        %p401 = scmp.lt.s32.totalorder %s19, 1
        %s402 = scalar_select %p401, %s19, 1
        %s403 = smul.addr %s402, 8
        %s404 = scalar_lea.vmem %s7, %s403
        %v406 = vld [vmem:[%s368] sm:$0xff]
        %v407 = vld [vmem:[%s368 + $0x8] sm:$0xff]
        %v408 = vld [vmem:[%s368 + $0x10] sm:$0xff]
        %v409 = vld [vmem:[%s368 + $0x18] sm:$0xff]
        %v410 = vld [vmem:[%s368 + $0x20] sm:$0xff]
        %v411 = vld [vmem:[%s368 + $0x28] sm:$0xff]
        %v412 = vld [vmem:[%s368 + $0x30] sm:$0xff]
        %v413 = vld [vmem:[%s368 + $0x38] sm:$0xff]
        %v414 = vld [vmem:[%s368 + $0x40] sm:$0xff]
        %v415 = vld [vmem:[%s368 + $0x48] sm:$0xff]
        %v416 = vld [vmem:[%s368 + $0x50] sm:$0xff]
        %v417 = vld [vmem:[%s368 + $0x58] sm:$0xff]
        %v418 = vld [vmem:[%s368 + $0x60] sm:$0xff]
        %v419 = vld [vmem:[%s368 + $0x68] sm:$0xff]
        %v420 = vld [vmem:[%s368 + $0x70] sm:$0xff]
        %v421 = vld [vmem:[%s368 + $0x78] sm:$0xff]
        %v422 = vld [vmem:[%s368 + $0x80] sm:$0xff]
        %v423 = vld [vmem:[%s368 + $0x88] sm:$0xff]
        %v424 = vld [vmem:[%s368 + $0x90] sm:$0xff]
        %v425 = vld [vmem:[%s368 + $0x98] sm:$0xff]
        %v426 = vpack.c.bf16 %v407, %v406
        %v427 = vpack.c.bf16 %v409, %v408
        %v428 = vpack.c.bf16 %v411, %v410
        %v429 = vpack.c.bf16 %v413, %v412
        %v430 = vpack.c.bf16 %v415, %v414
        %v431 = vpack.c.bf16 %v417, %v416
        %v432 = vpack.c.bf16 %v419, %v418
        %v433 = vpack.c.bf16 %v421, %v420
        %v434 = vld [vmem:[#allocation3] sm:$0xf]
        %v435 = vld [vmem:[#allocation3 + $0x4] sm:$0xf]
        %v436 = vld [vmem:[#allocation3 + $0x8] sm:$0xf]
        %v437 = vld [vmem:[#allocation3 + $0xc] sm:$0xf]
        %v438 = vld [vmem:[#allocation3 + $0x10] sm:$0xf]
        %v439 = vld [vmem:[#allocation3 + $0x14] sm:$0xf]
        %v440 = vld [vmem:[#allocation3 + $0x18] sm:$0xf]
        %v441 = vld [vmem:[#allocation3 + $0x1c] sm:$0xf]
        %v442 = vld [vmem:[#allocation3 + $0x20] sm:$0xf]
        %v443 = vld [vmem:[#allocation3 + $0x24] sm:$0xf]
        %v444 = vpack.c.bf16 %v408, %v407
        %v445 = vpack.c.bf16 %v410, %v409
        %v446 = vpack.c.bf16 %v412, %v411
        %v447 = vpack.c.bf16 %v414, %v413
        %v448 = vpack.c.bf16 %v416, %v415
        %v449 = vpack.c.bf16 %v418, %v417
        %v450 = vpack.c.bf16 %v420, %v419
        %v451 = vpack.c.bf16 %v422, %v421
        %s452 = scalar_lea.vmem [#allocation3], 40
        %v453 = vld [vmem:[%s452] sm:$0xf]
        %v454 = vld [vmem:[%s452 + $0x4] sm:$0xf]
        %v455 = vld [vmem:[%s452 + $0x8] sm:$0xf]
        %v456 = vld [vmem:[%s452 + $0xc] sm:$0xf]
        %v457 = vld [vmem:[%s452 + $0x10] sm:$0xf]
        %v458 = vld [vmem:[%s452 + $0x14] sm:$0xf]
        %v459 = vld [vmem:[%s452 + $0x18] sm:$0xf]
        %v460 = vld [vmem:[%s452 + $0x1c] sm:$0xf]
        %v461 = vld [vmem:[%s452 + $0x20] sm:$0xf]
        %v462 = vld [vmem:[%s452 + $0x24] sm:$0xf]
        %v473 = vunpack.c.l.b16 %v453
        %v474 = vunpack.c.l.b16 %v454
        %v475 = vunpack.c.l.b16 %v455
        %v476 = vunpack.c.l.b16 %v456
        %v477 = vunpack.c.l.b16 %v457
        %v478 = vunpack.c.l.b16 %v458
        %v479 = vunpack.c.l.b16 %v459
        %v480 = vunpack.c.l.b16 %v460
        %v481 = vunpack.c.l.b16 %v461
        %v482 = vunpack.c.l.b16 %v462
        %v483 = vpack.c.b16 %v474, %v473
        %v484 = vpack.c.b16 %v476, %v475
        %v485 = vpack.c.b16 %v478, %v477
        %v486 = vpack.c.b16 %v480, %v479
        %v487 = vpack.c.b16 %v482, %v481
        %vm493 = vcmask 654336
        %v495 = vsel %vm493, %v444, 0
        %v498 = vsel %vm493, %v445, 0
        %v501 = vsel %vm493, %v446, 0
        %v504 = vsel %vm493, %v447, 0
        %v507 = vsel %vm493, %v448, 0
        %v510 = vsel %vm493, %v449, 0
        %v513 = vsel %vm493, %v450, 0
        %v516 = vsel %vm493, %v451, 0
        %518 = vmatpush.bf16.msra.mxu0 0
        %519 = vmatpush.bf16.msra.mxu0 0
        %520 = vmatpush.bf16.msra.mxu0 0
        %521 = vmatpush.bf16.msra.mxu0 %v487
        %522 = vmatpush.bf16.msra.mxu0 %v486
        %523 = vmatpush.bf16.msra.mxu0 %v485
        %524 = vmatpush.bf16.msra.mxu0 %v484
        %525 = vmatpush.bf16.msra.mxu0 %v483
        %526 = vmatmul.bf16.gmra.mxu0 %v495
        %v527 = vpop.f32.mrf.mxu0
        %v528 = vadd.f32 0.0, %v527
        %v529 = vpop.f32.mrf.mxu0
        %v530 = vadd.f32 0.0, %v529
        %531 = vmatmul.bf16.gmra.mxu0 %v498
        %v532 = vpop.f32.mrf.mxu0
        %v533 = vadd.f32 0.0, %v532
        %v534 = vpop.f32.mrf.mxu0
        %v535 = vadd.f32 0.0, %v534
        %536 = vmatmul.bf16.gmra.mxu0 %v501
        %v537 = vpop.f32.mrf.mxu0
        %v538 = vadd.f32 0.0, %v537
        %v539 = vpop.f32.mrf.mxu0
        %v540 = vadd.f32 0.0, %v539
        %541 = vmatmul.bf16.gmra.mxu0 %v504
        %v542 = vpop.f32.mrf.mxu0
        %v543 = vadd.f32 0.0, %v542
        %v544 = vpop.f32.mrf.mxu0
        %v545 = vadd.f32 0.0, %v544
        %546 = vmatmul.bf16.gmra.mxu0 %v507
        %v547 = vpop.f32.mrf.mxu0
        %v548 = vadd.f32 0.0, %v547
        %v549 = vpop.f32.mrf.mxu0
        %v550 = vadd.f32 0.0, %v549
        %551 = vmatmul.bf16.gmra.mxu0 %v510
        %v552 = vpop.f32.mrf.mxu0
        %v553 = vadd.f32 0.0, %v552
        %v554 = vpop.f32.mrf.mxu0
        %v555 = vadd.f32 0.0, %v554
        %556 = vmatmul.bf16.gmra.mxu0 %v513
        %v557 = vpop.f32.mrf.mxu0
        %v558 = vadd.f32 0.0, %v557
        %v559 = vpop.f32.mrf.mxu0
        %v560 = vadd.f32 0.0, %v559
        %561 = vmatmul.bf16.gmra.mxu0 %v516
        %v562 = vpop.f32.mrf.mxu0
        %v563 = vadd.f32 0.0, %v562
        %v564 = vpop.f32.mrf.mxu0
        %v565 = vadd.f32 0.0, %v564
        %566 = vdwg.mxu0
        %v577 = vunpack.c.l.b16 %v434
        %v578 = vunpack.c.l.b16 %v435
        %v579 = vunpack.c.l.b16 %v436
        %v580 = vunpack.c.l.b16 %v437
        %v581 = vunpack.c.l.b16 %v438
        %v582 = vunpack.c.l.b16 %v439
        %v583 = vunpack.c.l.b16 %v440
        %v584 = vunpack.c.l.b16 %v441
        %v585 = vunpack.c.l.b16 %v442
        %v586 = vunpack.c.l.b16 %v443
        %v587 = vpack.c.b16 %v578, %v577
        %v588 = vpack.c.b16 %v580, %v579
        %v589 = vpack.c.b16 %v582, %v581
        %v590 = vpack.c.b16 %v584, %v583
        %v591 = vpack.c.b16 %v586, %v585
        %v598 = vsel %vm493, %v426, 0
        %v601 = vsel %vm493, %v427, 0
        %v604 = vsel %vm493, %v428, 0
        %v607 = vsel %vm493, %v429, 0
        %v610 = vsel %vm493, %v430, 0
        %v613 = vsel %vm493, %v431, 0
        %v616 = vsel %vm493, %v432, 0
        %v619 = vsel %vm493, %v433, 0
        %621 = vmatpush.bf16.msra.mxu0 0
        %622 = vmatpush.bf16.msra.mxu0 0
        %623 = vmatpush.bf16.msra.mxu0 0
        %624 = vmatpush.bf16.msra.mxu0 %v591
        %625 = vmatpush.bf16.msra.mxu0 %v590
        %626 = vmatpush.bf16.msra.mxu0 %v589
        %627 = vmatpush.bf16.msra.mxu0 %v588
        %628 = vmatpush.bf16.msra.mxu0 %v587
        %629 = vmatmul.bf16.gmra.mxu0 %v598
        %v630 = vpop.f32.mrf.mxu0
        %v631 = vadd.f32 %v528, %v630
        %v632 = vpop.f32.mrf.mxu0
        %v633 = vadd.f32 %v530, %v632
        %634 = vmatmul.bf16.gmra.mxu0 %v601
        %v635 = vpop.f32.mrf.mxu0
        %v636 = vadd.f32 %v533, %v635
        %v637 = vpop.f32.mrf.mxu0
        %v638 = vadd.f32 %v535, %v637
        %639 = vmatmul.bf16.gmra.mxu0 %v604
        %v640 = vpop.f32.mrf.mxu0
        %v641 = vadd.f32 %v538, %v640
        %v642 = vpop.f32.mrf.mxu0
        %v643 = vadd.f32 %v540, %v642
        %644 = vmatmul.bf16.gmra.mxu0 %v607
        %v645 = vpop.f32.mrf.mxu0
        %v646 = vadd.f32 %v543, %v645
        %v647 = vpop.f32.mrf.mxu0
        %v648 = vadd.f32 %v545, %v647
        %649 = vmatmul.bf16.gmra.mxu0 %v610
        %v650 = vpop.f32.mrf.mxu0
        %v651 = vadd.f32 %v548, %v650
        %v652 = vpop.f32.mrf.mxu0
        %v653 = vadd.f32 %v550, %v652
        %654 = vmatmul.bf16.gmra.mxu0 %v613
        %v655 = vpop.f32.mrf.mxu0
        %v656 = vadd.f32 %v553, %v655
        %v657 = vpop.f32.mrf.mxu0
        %v658 = vadd.f32 %v555, %v657
        %659 = vmatmul.bf16.gmra.mxu0 %v616
        %v660 = vpop.f32.mrf.mxu0
        %v661 = vadd.f32 %v558, %v660
        %v662 = vpop.f32.mrf.mxu0
        %v663 = vadd.f32 %v560, %v662
        %664 = vmatmul.bf16.gmra.mxu0 %v619
        %v665 = vpop.f32.mrf.mxu0
        %v666 = vadd.f32 %v563, %v665
        %v667 = vpop.f32.mrf.mxu0
        %v668 = vadd.f32 %v565, %v667
        %669 = vdwg.mxu0
        %v670 = vpack.c.bf16 %v423, %v422
        %s671 = scalar_lea.vmem [#allocation3], 80
        %v672 = vld [vmem:[%s671] sm:$0xf]
        %v673 = vld [vmem:[%s671 + $0x4] sm:$0xf]
        %v674 = vld [vmem:[%s671 + $0x8] sm:$0xf]
        %v675 = vld [vmem:[%s671 + $0xc] sm:$0xf]
        %v676 = vld [vmem:[%s671 + $0x10] sm:$0xf]
        %v677 = vld [vmem:[%s671 + $0x14] sm:$0xf]
        %v678 = vld [vmem:[%s671 + $0x18] sm:$0xf]
        %v679 = vld [vmem:[%s671 + $0x1c] sm:$0xf]
        %v680 = vld [vmem:[%s671 + $0x20] sm:$0xf]
        %v681 = vld [vmem:[%s671 + $0x24] sm:$0xf]
        %v692 = vunpack.c.l.b16 %v672
        %v693 = vunpack.c.l.b16 %v673
        %v694 = vunpack.c.l.b16 %v674
        %v695 = vunpack.c.l.b16 %v675
        %v696 = vunpack.c.l.b16 %v676
        %v697 = vunpack.c.l.b16 %v677
        %v698 = vunpack.c.l.b16 %v678
        %v699 = vunpack.c.l.b16 %v679
        %v700 = vunpack.c.l.b16 %v680
        %v701 = vunpack.c.l.b16 %v681
        %v702 = vpack.c.b16 %v693, %v692
        %v703 = vpack.c.b16 %v695, %v694
        %v704 = vpack.c.b16 %v697, %v696
        %v705 = vpack.c.b16 %v699, %v698
        %v706 = vpack.c.b16 %v701, %v700
        %v713 = vsel %vm493, %v670, 0
        %715 = vmatpush.bf16.msra.mxu0 0
        %716 = vmatpush.bf16.msra.mxu0 0
        %717 = vmatpush.bf16.msra.mxu0 0
        %718 = vmatpush.bf16.msra.mxu0 %v706
        %719 = vmatpush.bf16.msra.mxu0 %v705
        %720 = vmatpush.bf16.msra.mxu0 %v704
        %721 = vmatpush.bf16.msra.mxu0 %v703
        %722 = vmatpush.bf16.msra.mxu0 %v702
        %723 = vmatmul.bf16.gmra.mxu0 %v601
        %v724 = vpop.f32.mrf.mxu0
        %v725 = vadd.f32 0.0, %v724
        %v726 = vpop.f32.mrf.mxu0
        %v727 = vadd.f32 0.0, %v726
        %728 = vmatmul.bf16.gmra.mxu0 %v604
        %v729 = vpop.f32.mrf.mxu0
        %v730 = vadd.f32 0.0, %v729
        %v731 = vpop.f32.mrf.mxu0
        %v732 = vadd.f32 0.0, %v731
        %733 = vmatmul.bf16.gmra.mxu0 %v607
        %v734 = vpop.f32.mrf.mxu0
        %v735 = vadd.f32 0.0, %v734
        %v736 = vpop.f32.mrf.mxu0
        %v737 = vadd.f32 0.0, %v736
        %738 = vmatmul.bf16.gmra.mxu0 %v610
        %v739 = vpop.f32.mrf.mxu0
        %v740 = vadd.f32 0.0, %v739
        %v741 = vpop.f32.mrf.mxu0
        %v742 = vadd.f32 0.0, %v741
        %743 = vmatmul.bf16.gmra.mxu0 %v613
        %v744 = vpop.f32.mrf.mxu0
        %v745 = vadd.f32 0.0, %v744
        %v746 = vpop.f32.mrf.mxu0
        %v747 = vadd.f32 0.0, %v746
        %748 = vmatmul.bf16.gmra.mxu0 %v616
        %v749 = vpop.f32.mrf.mxu0
        %v750 = vadd.f32 0.0, %v749
        %v751 = vpop.f32.mrf.mxu0
        %v752 = vadd.f32 0.0, %v751
        %753 = vmatmul.bf16.gmra.mxu0 %v619
        %v754 = vpop.f32.mrf.mxu0
        %v755 = vadd.f32 0.0, %v754
        %v756 = vpop.f32.mrf.mxu0
        %v757 = vadd.f32 0.0, %v756
        %758 = vmatmul.bf16.gmra.mxu0 %v713
        %v759 = vpop.f32.mrf.mxu0
        %v760 = vadd.f32 0.0, %v759
        %v761 = vpop.f32.mrf.mxu0
        %v762 = vadd.f32 0.0, %v761
        %763 = vdwg.mxu0
        %v764 = vadd.f32 %v631, %v725
        %v765 = vadd.f32 %v633, %v727
        %v766 = vadd.f32 %v636, %v730
        %v767 = vadd.f32 %v638, %v732
        %v768 = vadd.f32 %v641, %v735
        %v769 = vadd.f32 %v643, %v737
        %v770 = vadd.f32 %v646, %v740
        %v771 = vadd.f32 %v648, %v742
        %v772 = vadd.f32 %v651, %v745
        %v773 = vadd.f32 %v653, %v747
        %v774 = vadd.f32 %v656, %v750
        %v775 = vadd.f32 %v658, %v752
        %v776 = vadd.f32 %v661, %v755
        %v777 = vadd.f32 %v663, %v757
        %v778 = vadd.f32 %v666, %v760
        %v779 = vadd.f32 %v668, %v762
        %v780 = vpack.c.bf16 %v424, %v423
        %s781 = scalar_lea.vmem [#allocation3], 120
        %v782 = vld [vmem:[%s781] sm:$0xf]
        %v783 = vld [vmem:[%s781 + $0x4] sm:$0xf]
        %v784 = vld [vmem:[%s781 + $0x8] sm:$0xf]
        %v785 = vld [vmem:[%s781 + $0xc] sm:$0xf]
        %v786 = vld [vmem:[%s781 + $0x10] sm:$0xf]
        %v787 = vld [vmem:[%s781 + $0x14] sm:$0xf]
        %v788 = vld [vmem:[%s781 + $0x18] sm:$0xf]
        %v789 = vld [vmem:[%s781 + $0x1c] sm:$0xf]
        %v790 = vld [vmem:[%s781 + $0x20] sm:$0xf]
        %v791 = vld [vmem:[%s781 + $0x24] sm:$0xf]
        %v802 = vunpack.c.l.b16 %v782
        %v803 = vunpack.c.l.b16 %v783
        %v804 = vunpack.c.l.b16 %v784
        %v805 = vunpack.c.l.b16 %v785
        %v806 = vunpack.c.l.b16 %v786
        %v807 = vunpack.c.l.b16 %v787
        %v808 = vunpack.c.l.b16 %v788
        %v809 = vunpack.c.l.b16 %v789
        %v810 = vunpack.c.l.b16 %v790
        %v811 = vunpack.c.l.b16 %v791
        %v812 = vpack.c.b16 %v803, %v802
        %v813 = vpack.c.b16 %v805, %v804
        %v814 = vpack.c.b16 %v807, %v806
        %v815 = vpack.c.b16 %v809, %v808
        %v816 = vpack.c.b16 %v811, %v810
        %v823 = vsel %vm493, %v780, 0
        %825 = vmatpush.bf16.msra.mxu0 0
        %826 = vmatpush.bf16.msra.mxu0 0
        %827 = vmatpush.bf16.msra.mxu0 0
        %828 = vmatpush.bf16.msra.mxu0 %v816
        %829 = vmatpush.bf16.msra.mxu0 %v815
        %830 = vmatpush.bf16.msra.mxu0 %v814
        %831 = vmatpush.bf16.msra.mxu0 %v813
        %832 = vmatpush.bf16.msra.mxu0 %v812
        %833 = vmatmul.bf16.gmra.mxu0 %v498
        %v834 = vpop.f32.mrf.mxu0
        %v835 = vadd.f32 0.0, %v834
        %v836 = vpop.f32.mrf.mxu0
        %v837 = vadd.f32 0.0, %v836
        %838 = vmatmul.bf16.gmra.mxu0 %v501
        %v839 = vpop.f32.mrf.mxu0
        %v840 = vadd.f32 0.0, %v839
        %v841 = vpop.f32.mrf.mxu0
        %v842 = vadd.f32 0.0, %v841
        %843 = vmatmul.bf16.gmra.mxu0 %v504
        %v844 = vpop.f32.mrf.mxu0
        %v845 = vadd.f32 0.0, %v844
        %v846 = vpop.f32.mrf.mxu0
        %v847 = vadd.f32 0.0, %v846
        %848 = vmatmul.bf16.gmra.mxu0 %v507
        %v849 = vpop.f32.mrf.mxu0
        %v850 = vadd.f32 0.0, %v849
        %v851 = vpop.f32.mrf.mxu0
        %v852 = vadd.f32 0.0, %v851
        %853 = vmatmul.bf16.gmra.mxu0 %v510
        %v854 = vpop.f32.mrf.mxu0
        %v855 = vadd.f32 0.0, %v854
        %v856 = vpop.f32.mrf.mxu0
        %v857 = vadd.f32 0.0, %v856
        %858 = vmatmul.bf16.gmra.mxu0 %v513
        %v859 = vpop.f32.mrf.mxu0
        %v860 = vadd.f32 0.0, %v859
        %v861 = vpop.f32.mrf.mxu0
        %v862 = vadd.f32 0.0, %v861
        %863 = vmatmul.bf16.gmra.mxu0 %v516
        %v864 = vpop.f32.mrf.mxu0
        %v865 = vadd.f32 0.0, %v864
        %v866 = vpop.f32.mrf.mxu0
        %v867 = vadd.f32 0.0, %v866
        %868 = vmatmul.bf16.gmra.mxu0 %v823
        %v869 = vpop.f32.mrf.mxu0
        %v870 = vadd.f32 0.0, %v869
        %v871 = vpop.f32.mrf.mxu0
        %v872 = vadd.f32 0.0, %v871
        %873 = vdwg.mxu0
        %v874 = vadd.f32 %v764, %v835
        %v875 = vadd.f32 %v765, %v837
        %v876 = vadd.f32 %v766, %v840
        %v877 = vadd.f32 %v767, %v842
        %v878 = vadd.f32 %v768, %v845
        %v879 = vadd.f32 %v769, %v847
        %v880 = vadd.f32 %v770, %v850
        %v881 = vadd.f32 %v771, %v852
        %v882 = vadd.f32 %v772, %v855
        %v883 = vadd.f32 %v773, %v857
        %v884 = vadd.f32 %v774, %v860
        %v885 = vadd.f32 %v775, %v862
        %v886 = vadd.f32 %v776, %v865
        %v887 = vadd.f32 %v777, %v867
        %v888 = vadd.f32 %v778, %v870
        %v889 = vadd.f32 %v779, %v872
        %v890 = vpack.c.bf16 %v425, %v424
        %s891 = scalar_lea.vmem [#allocation3], 160
        %v892 = vld [vmem:[%s891] sm:$0xf]
        %v893 = vld [vmem:[%s891 + $0x4] sm:$0xf]
        %v894 = vld [vmem:[%s891 + $0x8] sm:$0xf]
        %v895 = vld [vmem:[%s891 + $0xc] sm:$0xf]
        %v896 = vld [vmem:[%s891 + $0x10] sm:$0xf]
        %v897 = vld [vmem:[%s891 + $0x14] sm:$0xf]
        %v898 = vld [vmem:[%s891 + $0x18] sm:$0xf]
        %v899 = vld [vmem:[%s891 + $0x1c] sm:$0xf]
        %v900 = vld [vmem:[%s891 + $0x20] sm:$0xf]
        %v901 = vld [vmem:[%s891 + $0x24] sm:$0xf]
        %v912 = vunpack.c.l.b16 %v892
        %v913 = vunpack.c.l.b16 %v893
        %v914 = vunpack.c.l.b16 %v894
        %v915 = vunpack.c.l.b16 %v895
        %v916 = vunpack.c.l.b16 %v896
        %v917 = vunpack.c.l.b16 %v897
        %v918 = vunpack.c.l.b16 %v898
        %v919 = vunpack.c.l.b16 %v899
        %v920 = vunpack.c.l.b16 %v900
        %v921 = vunpack.c.l.b16 %v901
        %v922 = vpack.c.b16 %v913, %v912
        %v923 = vpack.c.b16 %v915, %v914
        %v924 = vpack.c.b16 %v917, %v916
        %v925 = vpack.c.b16 %v919, %v918
        %v926 = vpack.c.b16 %v921, %v920
        %v933 = vsel %vm493, %v890, 0
        %935 = vmatpush.bf16.msra.mxu0 0
        %936 = vmatpush.bf16.msra.mxu0 0
        %937 = vmatpush.bf16.msra.mxu0 0
        %938 = vmatpush.bf16.msra.mxu0 %v926
        %939 = vmatpush.bf16.msra.mxu0 %v925
        %940 = vmatpush.bf16.msra.mxu0 %v924
        %941 = vmatpush.bf16.msra.mxu0 %v923
        %942 = vmatpush.bf16.msra.mxu0 %v922
        %943 = vmatmul.bf16.gmra.mxu0 %v604
        %v944 = vpop.f32.mrf.mxu0
        %v945 = vadd.f32 0.0, %v944
        %v946 = vpop.f32.mrf.mxu0
        %v947 = vadd.f32 0.0, %v946
        %948 = vmatmul.bf16.gmra.mxu0 %v607
        %v949 = vpop.f32.mrf.mxu0
        %v950 = vadd.f32 0.0, %v949
        %v951 = vpop.f32.mrf.mxu0
        %v952 = vadd.f32 0.0, %v951
        %953 = vmatmul.bf16.gmra.mxu0 %v610
        %v954 = vpop.f32.mrf.mxu0
        %v955 = vadd.f32 0.0, %v954
        %v956 = vpop.f32.mrf.mxu0
        %v957 = vadd.f32 0.0, %v956
        %958 = vmatmul.bf16.gmra.mxu0 %v613
        %v959 = vpop.f32.mrf.mxu0
        %v960 = vadd.f32 0.0, %v959
        %v961 = vpop.f32.mrf.mxu0
        %v962 = vadd.f32 0.0, %v961
        %963 = vmatmul.bf16.gmra.mxu0 %v616
        %v964 = vpop.f32.mrf.mxu0
        %v965 = vadd.f32 0.0, %v964
        %v966 = vpop.f32.mrf.mxu0
        %v967 = vadd.f32 0.0, %v966
        %968 = vmatmul.bf16.gmra.mxu0 %v619
        %v969 = vpop.f32.mrf.mxu0
        %v970 = vadd.f32 0.0, %v969
        %v971 = vpop.f32.mrf.mxu0
        %v972 = vadd.f32 0.0, %v971
        %973 = vmatmul.bf16.gmra.mxu0 %v713
        %v974 = vpop.f32.mrf.mxu0
        %v975 = vadd.f32 0.0, %v974
        %v976 = vpop.f32.mrf.mxu0
        %v977 = vadd.f32 0.0, %v976
        %978 = vmatmul.bf16.gmra.mxu0 %v933
        %v979 = vpop.f32.mrf.mxu0
        %v980 = vadd.f32 0.0, %v979
        %v981 = vpop.f32.mrf.mxu0
        %v982 = vadd.f32 0.0, %v981
        %983 = vdwg.mxu0
        %v984 = vadd.f32 %v874, %v945
        %v985 = vadd.f32 %v875, %v947
        %v986 = vadd.f32 %v876, %v950
        %v987 = vadd.f32 %v877, %v952
        %v988 = vadd.f32 %v878, %v955
        %v989 = vadd.f32 %v879, %v957
        %v990 = vadd.f32 %v880, %v960
        %v991 = vadd.f32 %v881, %v962
        %v992 = vadd.f32 %v882, %v965
        %v993 = vadd.f32 %v883, %v967
        %v994 = vadd.f32 %v884, %v970
        %v995 = vadd.f32 %v885, %v972
        %v996 = vadd.f32 %v886, %v975
        %v997 = vadd.f32 %v887, %v977
        %v998 = vadd.f32 %v888, %v980
        %v999 = vadd.f32 %v889, %v982
        %v1000 = vld [vmem:[%s2] sm:$0x1]
        %v1002 = vperm.slane %v1000, 0
        %v1004 = vadd.f32 %v984, %v1002
        %v1005 = vadd.f32 %v985, %v1002
        %v1006 = vadd.f32 %v986, %v1002
        %v1007 = vadd.f32 %v987, %v1002
        %v1008 = vadd.f32 %v988, %v1002
        %v1009 = vadd.f32 %v989, %v1002
        %v1010 = vadd.f32 %v990, %v1002
        %v1011 = vadd.f32 %v991, %v1002
        %v1012 = vadd.f32 %v992, %v1002
        %v1013 = vadd.f32 %v993, %v1002
        %v1014 = vadd.f32 %v994, %v1002
        %v1015 = vadd.f32 %v995, %v1002
        %v1016 = vadd.f32 %v996, %v1002
        %v1017 = vadd.f32 %v997, %v1002
        %v1018 = vadd.f32 %v998, %v1002
        %v1019 = vadd.f32 %v999, %v1002
        %v1020 = vmax.f32 %v1004, 0.0
        %v1021 = vmax.f32 %v1005, 0.0
        %v1022 = vmax.f32 %v1006, 0.0
        %v1023 = vmax.f32 %v1007, 0.0
        %v1024 = vmax.f32 %v1008, 0.0
        %v1025 = vmax.f32 %v1009, 0.0
        %v1026 = vmax.f32 %v1010, 0.0
        %v1027 = vmax.f32 %v1011, 0.0
        %v1028 = vmax.f32 %v1012, 0.0
        %v1029 = vmax.f32 %v1013, 0.0
        %v1030 = vmax.f32 %v1014, 0.0
        %v1031 = vmax.f32 %v1015, 0.0
        %v1032 = vmax.f32 %v1016, 0.0
        %v1033 = vmax.f32 %v1017, 0.0
        %v1034 = vmax.f32 %v1018, 0.0
        %v1035 = vmax.f32 %v1019, 0.0
        %1052 = vrot.lane.b32.xlu0 %v1020, 120
        %v1053 = vpop.permute.xlu0 %1052
        %1054 = vrot.lane.b32.xlu0 %v1021, 120
        %v1055 = vpop.permute.xlu0 %1054
        %1056 = vrot.lane.b32.xlu0 %v1022, 120
        %v1057 = vpop.permute.xlu0 %1056
        %1058 = vrot.lane.b32.xlu0 %v1023, 120
        %v1059 = vpop.permute.xlu0 %1058
        %1060 = vrot.lane.b32.xlu0 %v1024, 120
        %v1061 = vpop.permute.xlu0 %1060
        %1062 = vrot.lane.b32.xlu0 %v1025, 120
        %v1063 = vpop.permute.xlu0 %1062
        %1064 = vrot.lane.b32.xlu0 %v1026, 120
        %v1065 = vpop.permute.xlu0 %1064
        %1066 = vrot.lane.b32.xlu0 %v1027, 120
        %v1067 = vpop.permute.xlu0 %1066
        %1068 = vrot.lane.b32.xlu0 %v1028, 120
        %v1069 = vpop.permute.xlu0 %1068
        %1070 = vrot.lane.b32.xlu0 %v1029, 120
        %v1071 = vpop.permute.xlu0 %1070
        %1072 = vrot.lane.b32.xlu0 %v1030, 120
        %v1073 = vpop.permute.xlu0 %1072
        %1074 = vrot.lane.b32.xlu0 %v1031, 120
        %v1075 = vpop.permute.xlu0 %1074
        %1076 = vrot.lane.b32.xlu0 %v1032, 120
        %v1077 = vpop.permute.xlu0 %1076
        %1078 = vrot.lane.b32.xlu0 %v1033, 120
        %v1079 = vpop.permute.xlu0 %1078
        %1080 = vrot.lane.b32.xlu0 %v1034, 120
        %v1081 = vpop.permute.xlu0 %1080
        %1082 = vrot.lane.b32.xlu0 %v1035, 120
        %v1083 = vpop.permute.xlu0 %1082
        %v1100 = vmax.f32 %v1020, %v1053
        %v1101 = vmax.f32 %v1021, %v1055
        %v1102 = vmax.f32 %v1022, %v1057
        %v1103 = vmax.f32 %v1023, %v1059
        %v1104 = vmax.f32 %v1024, %v1061
        %v1105 = vmax.f32 %v1025, %v1063
        %v1106 = vmax.f32 %v1026, %v1065
        %v1107 = vmax.f32 %v1027, %v1067
        %v1108 = vmax.f32 %v1028, %v1069
        %v1109 = vmax.f32 %v1029, %v1071
        %v1110 = vmax.f32 %v1030, %v1073
        %v1111 = vmax.f32 %v1031, %v1075
        %v1112 = vmax.f32 %v1032, %v1077
        %v1113 = vmax.f32 %v1033, %v1079
        %v1114 = vmax.f32 %v1034, %v1081
        %v1115 = vmax.f32 %v1035, %v1083
        %1116 = vrot.lane.b32.xlu0 %v1020, 112
        %v1117 = vpop.permute.xlu0 %1116
        %1118 = vrot.lane.b32.xlu0 %v1021, 112
        %v1119 = vpop.permute.xlu0 %1118
        %1120 = vrot.lane.b32.xlu0 %v1022, 112
        %v1121 = vpop.permute.xlu0 %1120
        %1122 = vrot.lane.b32.xlu0 %v1023, 112
        %v1123 = vpop.permute.xlu0 %1122
        %1124 = vrot.lane.b32.xlu0 %v1024, 112
        %v1125 = vpop.permute.xlu0 %1124
        %1126 = vrot.lane.b32.xlu0 %v1025, 112
        %v1127 = vpop.permute.xlu0 %1126
        %1128 = vrot.lane.b32.xlu0 %v1026, 112
        %v1129 = vpop.permute.xlu0 %1128
        %1130 = vrot.lane.b32.xlu0 %v1027, 112
        %v1131 = vpop.permute.xlu0 %1130
        %1132 = vrot.lane.b32.xlu0 %v1028, 112
        %v1133 = vpop.permute.xlu0 %1132
        %1134 = vrot.lane.b32.xlu0 %v1029, 112
        %v1135 = vpop.permute.xlu0 %1134
        %1136 = vrot.lane.b32.xlu0 %v1030, 112
        %v1137 = vpop.permute.xlu0 %1136
        %1138 = vrot.lane.b32.xlu0 %v1031, 112
        %v1139 = vpop.permute.xlu0 %1138
        %1140 = vrot.lane.b32.xlu0 %v1032, 112
        %v1141 = vpop.permute.xlu0 %1140
        %1142 = vrot.lane.b32.xlu0 %v1033, 112
        %v1143 = vpop.permute.xlu0 %1142
        %1144 = vrot.lane.b32.xlu0 %v1034, 112
        %v1145 = vpop.permute.xlu0 %1144
        %1146 = vrot.lane.b32.xlu0 %v1035, 112
        %v1147 = vpop.permute.xlu0 %1146
        %v1164 = vmax.f32 %v1100, %v1117
        %v1165 = vmax.f32 %v1101, %v1119
        %v1166 = vmax.f32 %v1102, %v1121
        %v1167 = vmax.f32 %v1103, %v1123
        %v1168 = vmax.f32 %v1104, %v1125
        %v1169 = vmax.f32 %v1105, %v1127
        %v1170 = vmax.f32 %v1106, %v1129
        %v1171 = vmax.f32 %v1107, %v1131
        %v1172 = vmax.f32 %v1108, %v1133
        %v1173 = vmax.f32 %v1109, %v1135
        %v1174 = vmax.f32 %v1110, %v1137
        %v1175 = vmax.f32 %v1111, %v1139
        %v1176 = vmax.f32 %v1112, %v1141
        %v1177 = vmax.f32 %v1113, %v1143
        %v1178 = vmax.f32 %v1114, %v1145
        %v1179 = vmax.f32 %v1115, %v1147
        %1180 = vrot.lane.b32.xlu0 %v1020, 104
        %v1181 = vpop.permute.xlu0 %1180
        %1182 = vrot.lane.b32.xlu0 %v1021, 104
        %v1183 = vpop.permute.xlu0 %1182
        %1184 = vrot.lane.b32.xlu0 %v1022, 104
        %v1185 = vpop.permute.xlu0 %1184
        %1186 = vrot.lane.b32.xlu0 %v1023, 104
        %v1187 = vpop.permute.xlu0 %1186
        %1188 = vrot.lane.b32.xlu0 %v1024, 104
        %v1189 = vpop.permute.xlu0 %1188
        %1190 = vrot.lane.b32.xlu0 %v1025, 104
        %v1191 = vpop.permute.xlu0 %1190
        %1192 = vrot.lane.b32.xlu0 %v1026, 104
        %v1193 = vpop.permute.xlu0 %1192
        %1194 = vrot.lane.b32.xlu0 %v1027, 104
        %v1195 = vpop.permute.xlu0 %1194
        %1196 = vrot.lane.b32.xlu0 %v1028, 104
        %v1197 = vpop.permute.xlu0 %1196
        %1198 = vrot.lane.b32.xlu0 %v1029, 104
        %v1199 = vpop.permute.xlu0 %1198
        %1200 = vrot.lane.b32.xlu0 %v1030, 104
        %v1201 = vpop.permute.xlu0 %1200
        %1202 = vrot.lane.b32.xlu0 %v1031, 104
        %v1203 = vpop.permute.xlu0 %1202
        %1204 = vrot.lane.b32.xlu0 %v1032, 104
        %v1205 = vpop.permute.xlu0 %1204
        %1206 = vrot.lane.b32.xlu0 %v1033, 104
        %v1207 = vpop.permute.xlu0 %1206
        %1208 = vrot.lane.b32.xlu0 %v1034, 104
        %v1209 = vpop.permute.xlu0 %1208
        %1210 = vrot.lane.b32.xlu0 %v1035, 104
        %v1211 = vpop.permute.xlu0 %1210
        %v1228 = vmax.f32 %v1164, %v1181
        %v1229 = vmax.f32 %v1165, %v1183
        %v1230 = vmax.f32 %v1166, %v1185
        %v1231 = vmax.f32 %v1167, %v1187
        %v1232 = vmax.f32 %v1168, %v1189
        %v1233 = vmax.f32 %v1169, %v1191
        %v1234 = vmax.f32 %v1170, %v1193
        %v1235 = vmax.f32 %v1171, %v1195
        %v1236 = vmax.f32 %v1172, %v1197
        %v1237 = vmax.f32 %v1173, %v1199
        %v1238 = vmax.f32 %v1174, %v1201
        %v1239 = vmax.f32 %v1175, %v1203
        %v1240 = vmax.f32 %v1176, %v1205
        %v1241 = vmax.f32 %v1177, %v1207
        %v1242 = vmax.f32 %v1178, %v1209
        %v1243 = vmax.f32 %v1179, %v1211
        %1244 = vrot.lane.b32.xlu0 %v1020, 96
        %v1245 = vpop.permute.xlu0 %1244
        %1246 = vrot.lane.b32.xlu0 %v1021, 96
        %v1247 = vpop.permute.xlu0 %1246
        %1248 = vrot.lane.b32.xlu0 %v1022, 96
        %v1249 = vpop.permute.xlu0 %1248
        %1250 = vrot.lane.b32.xlu0 %v1023, 96
        %v1251 = vpop.permute.xlu0 %1250
        %1252 = vrot.lane.b32.xlu0 %v1024, 96
        %v1253 = vpop.permute.xlu0 %1252
        %1254 = vrot.lane.b32.xlu0 %v1025, 96
        %v1255 = vpop.permute.xlu0 %1254
        %1256 = vrot.lane.b32.xlu0 %v1026, 96
        %v1257 = vpop.permute.xlu0 %1256
        %1258 = vrot.lane.b32.xlu0 %v1027, 96
        %v1259 = vpop.permute.xlu0 %1258
        %1260 = vrot.lane.b32.xlu0 %v1028, 96
        %v1261 = vpop.permute.xlu0 %1260
        %1262 = vrot.lane.b32.xlu0 %v1029, 96
        %v1263 = vpop.permute.xlu0 %1262
        %1264 = vrot.lane.b32.xlu0 %v1030, 96
        %v1265 = vpop.permute.xlu0 %1264
        %1266 = vrot.lane.b32.xlu0 %v1031, 96
        %v1267 = vpop.permute.xlu0 %1266
        %1268 = vrot.lane.b32.xlu0 %v1032, 96
        %v1269 = vpop.permute.xlu0 %1268
        %1270 = vrot.lane.b32.xlu0 %v1033, 96
        %v1271 = vpop.permute.xlu0 %1270
        %1272 = vrot.lane.b32.xlu0 %v1034, 96
        %v1273 = vpop.permute.xlu0 %1272
        %1274 = vrot.lane.b32.xlu0 %v1035, 96
        %v1275 = vpop.permute.xlu0 %1274
        %v1292 = vmax.f32 %v1228, %v1245
        %v1293 = vmax.f32 %v1229, %v1247
        %v1294 = vmax.f32 %v1230, %v1249
        %v1295 = vmax.f32 %v1231, %v1251
        %v1296 = vmax.f32 %v1232, %v1253
        %v1297 = vmax.f32 %v1233, %v1255
        %v1298 = vmax.f32 %v1234, %v1257
        %v1299 = vmax.f32 %v1235, %v1259
        %v1300 = vmax.f32 %v1236, %v1261
        %v1301 = vmax.f32 %v1237, %v1263
        %v1302 = vmax.f32 %v1238, %v1265
        %v1303 = vmax.f32 %v1239, %v1267
        %v1304 = vmax.f32 %v1240, %v1269
        %v1305 = vmax.f32 %v1241, %v1271
        %v1306 = vmax.f32 %v1242, %v1273
        %v1307 = vmax.f32 %v1243, %v1275
        %v1308 = vmax.f32 %v1292, %v1293
        %v1309 = vmax.f32 %v1293, %v1294
        %v1310 = vmax.f32 %v1294, %v1295
        %v1311 = vmax.f32 %v1295, %v1296
        %v1312 = vmax.f32 %v1296, %v1297
        %v1313 = vmax.f32 %v1297, %v1298
        %v1314 = vmax.f32 %v1298, %v1299
        %v1315 = vmax.f32 %v1299, %v1300
        %v1316 = vmax.f32 %v1300, %v1301
        %v1317 = vmax.f32 %v1301, %v1302
        %v1318 = vmax.f32 %v1302, %v1303
        %v1319 = vmax.f32 %v1303, %v1304
        %v1320 = vmax.f32 %v1308, %v1294
        %v1321 = vmax.f32 %v1309, %v1295
        %v1322 = vmax.f32 %v1310, %v1296
        %v1323 = vmax.f32 %v1311, %v1297
        %v1324 = vmax.f32 %v1312, %v1298
        %v1325 = vmax.f32 %v1313, %v1299
        %v1326 = vmax.f32 %v1314, %v1300
        %v1327 = vmax.f32 %v1315, %v1301
        %v1328 = vmax.f32 %v1316, %v1302
        %v1329 = vmax.f32 %v1317, %v1303
        %v1330 = vmax.f32 %v1318, %v1304
        %v1331 = vmax.f32 %v1319, %v1305
        %v1332 = vmax.f32 %v1320, %v1295
        %v1333 = vmax.f32 %v1321, %v1296
        %v1334 = vmax.f32 %v1322, %v1297
        %v1335 = vmax.f32 %v1323, %v1298
        %v1336 = vmax.f32 %v1324, %v1299
        %v1337 = vmax.f32 %v1325, %v1300
        %v1338 = vmax.f32 %v1326, %v1301
        %v1339 = vmax.f32 %v1327, %v1302
        %v1340 = vmax.f32 %v1328, %v1303
        %v1341 = vmax.f32 %v1329, %v1304
        %v1342 = vmax.f32 %v1330, %v1305
        %v1343 = vmax.f32 %v1331, %v1306
        %v1344 = vmax.f32 %v1332, %v1296
        %v1345 = vmax.f32 %v1333, %v1297
        %v1346 = vmax.f32 %v1334, %v1298
        %v1347 = vmax.f32 %v1335, %v1299
        %v1348 = vmax.f32 %v1336, %v1300
        %v1349 = vmax.f32 %v1337, %v1301
        %v1350 = vmax.f32 %v1338, %v1302
        %v1351 = vmax.f32 %v1339, %v1303
        %v1352 = vmax.f32 %v1340, %v1304
        %v1353 = vmax.f32 %v1341, %v1305
        %v1354 = vmax.f32 %v1342, %v1306
        %v1355 = vmax.f32 %v1343, %v1307
        %v1356 = vpack.c.bf16 %v1345, %v1344
        %v1357 = vpack.c.bf16 %v1347, %v1346
        %v1358 = vpack.c.bf16 %v1349, %v1348
        %v1359 = vpack.c.bf16 %v1351, %v1350
        %v1360 = vld [vmem:[%s3] sm:$0xf]
        %v1361 = vld [vmem:[%s3 + $0x4] sm:$0xf]
        %v1362 = vld [vmem:[%s3 + $0x8] sm:$0xf]
        %v1363 = vld [vmem:[%s3 + $0xc] sm:$0xf]
        %v1364 = vld [vmem:[%s3 + $0x10] sm:$0xf]
        %v1365 = vld [vmem:[%s3 + $0x14] sm:$0xf]
        %v1366 = vld [vmem:[%s3 + $0x18] sm:$0xf]
        %v1367 = vld [vmem:[%s3 + $0x1c] sm:$0xf]
        %v1368 = vld [vmem:[%s3 + $0x20] sm:$0xf]
        %v1369 = vld [vmem:[%s3 + $0x24] sm:$0xf]
        %v1370 = vld [vmem:[%s3 + $0x28] sm:$0xf]
        %v1371 = vld [vmem:[%s3 + $0x2c] sm:$0xf]
        %v1372 = vpack.c.bf16 %v1346, %v1345
        %v1373 = vpack.c.bf16 %v1348, %v1347
        %v1374 = vpack.c.bf16 %v1350, %v1349
        %v1375 = vpack.c.bf16 %v1352, %v1351
        %s1376 = scalar_lea.vmem %s3, 48
        %v1377 = vld [vmem:[%s1376] sm:$0xf]
        %v1378 = vld [vmem:[%s1376 + $0x4] sm:$0xf]
        %v1379 = vld [vmem:[%s1376 + $0x8] sm:$0xf]
        %v1380 = vld [vmem:[%s1376 + $0xc] sm:$0xf]
        %v1381 = vld [vmem:[%s1376 + $0x10] sm:$0xf]
        %v1382 = vld [vmem:[%s1376 + $0x14] sm:$0xf]
        %v1383 = vld [vmem:[%s1376 + $0x18] sm:$0xf]
        %v1384 = vld [vmem:[%s1376 + $0x1c] sm:$0xf]
        %v1385 = vld [vmem:[%s1376 + $0x20] sm:$0xf]
        %v1386 = vld [vmem:[%s1376 + $0x24] sm:$0xf]
        %v1387 = vld [vmem:[%s1376 + $0x28] sm:$0xf]
        %v1388 = vld [vmem:[%s1376 + $0x2c] sm:$0xf]
        %v1401 = vunpack.c.l.b16 %v1377
        %v1402 = vunpack.c.l.b16 %v1378
        %v1403 = vunpack.c.l.b16 %v1379
        %v1404 = vunpack.c.l.b16 %v1380
        %v1405 = vunpack.c.l.b16 %v1381
        %v1406 = vunpack.c.l.b16 %v1382
        %v1407 = vunpack.c.l.b16 %v1383
        %v1408 = vunpack.c.l.b16 %v1384
        %v1409 = vunpack.c.l.b16 %v1385
        %v1410 = vunpack.c.l.b16 %v1386
        %v1411 = vunpack.c.l.b16 %v1387
        %v1412 = vunpack.c.l.b16 %v1388
        %v1413 = vpack.c.b16 %v1402, %v1401
        %v1414 = vpack.c.b16 %v1404, %v1403
        %v1415 = vpack.c.b16 %v1406, %v1405
        %v1416 = vpack.c.b16 %v1408, %v1407
        %v1417 = vpack.c.b16 %v1410, %v1409
        %v1418 = vpack.c.b16 %v1412, %v1411
        %vm1425 = vcmask 785408
        %v1427 = vsel %vm1425, %v1372, 0
        %v1430 = vsel %vm1425, %v1373, 0
        %v1433 = vsel %vm1425, %v1374, 0
        %v1436 = vsel %vm1425, %v1375, 0
        %1438 = vmatpush.bf16.msra.mxu0 0
        %1439 = vmatpush.bf16.msra.mxu0 0
        %1440 = vmatpush.bf16.msra.mxu0 %v1418
        %1441 = vmatpush.bf16.msra.mxu0 %v1417
        %1442 = vmatpush.bf16.msra.mxu0 %v1416
        %1443 = vmatpush.bf16.msra.mxu0 %v1415
        %1444 = vmatpush.bf16.msra.mxu0 %v1414
        %1445 = vmatpush.bf16.msra.mxu0 %v1413
        %1446 = vmatmul.bf16.gmra.mxu0 %v1427
        %v1447 = vpop.f32.mrf.mxu0
        %v1448 = vadd.f32 0.0, %v1447
        %v1449 = vpop.f32.mrf.mxu0
        %v1450 = vadd.f32 0.0, %v1449
        %1451 = vmatmul.bf16.gmra.mxu0 %v1430
        %v1452 = vpop.f32.mrf.mxu0
        %v1453 = vadd.f32 0.0, %v1452
        %v1454 = vpop.f32.mrf.mxu0
        %v1455 = vadd.f32 0.0, %v1454
        %1456 = vmatmul.bf16.gmra.mxu0 %v1433
        %v1457 = vpop.f32.mrf.mxu0
        %v1458 = vadd.f32 0.0, %v1457
        %v1459 = vpop.f32.mrf.mxu0
        %v1460 = vadd.f32 0.0, %v1459
        %1461 = vmatmul.bf16.gmra.mxu0 %v1436
        %v1462 = vpop.f32.mrf.mxu0
        %v1463 = vadd.f32 0.0, %v1462
        %v1464 = vpop.f32.mrf.mxu0
        %v1465 = vadd.f32 0.0, %v1464
        %1466 = vdwg.mxu0
        %v1479 = vunpack.c.l.b16 %v1360
        %v1480 = vunpack.c.l.b16 %v1361
        %v1481 = vunpack.c.l.b16 %v1362
        %v1482 = vunpack.c.l.b16 %v1363
        %v1483 = vunpack.c.l.b16 %v1364
        %v1484 = vunpack.c.l.b16 %v1365
        %v1485 = vunpack.c.l.b16 %v1366
        %v1486 = vunpack.c.l.b16 %v1367
        %v1487 = vunpack.c.l.b16 %v1368
        %v1488 = vunpack.c.l.b16 %v1369
        %v1489 = vunpack.c.l.b16 %v1370
        %v1490 = vunpack.c.l.b16 %v1371
        %v1491 = vpack.c.b16 %v1480, %v1479
        %v1492 = vpack.c.b16 %v1482, %v1481
        %v1493 = vpack.c.b16 %v1484, %v1483
        %v1494 = vpack.c.b16 %v1486, %v1485
        %v1495 = vpack.c.b16 %v1488, %v1487
        %v1496 = vpack.c.b16 %v1490, %v1489
        %v1504 = vsel %vm1425, %v1356, 0
        %v1507 = vsel %vm1425, %v1357, 0
        %v1510 = vsel %vm1425, %v1358, 0
        %v1513 = vsel %vm1425, %v1359, 0
        %1515 = vmatpush.bf16.msra.mxu0 0
        %1516 = vmatpush.bf16.msra.mxu0 0
        %1517 = vmatpush.bf16.msra.mxu0 %v1496
        %1518 = vmatpush.bf16.msra.mxu0 %v1495
        %1519 = vmatpush.bf16.msra.mxu0 %v1494
        %1520 = vmatpush.bf16.msra.mxu0 %v1493
        %1521 = vmatpush.bf16.msra.mxu0 %v1492
        %1522 = vmatpush.bf16.msra.mxu0 %v1491
        %1523 = vmatmul.bf16.gmra.mxu0 %v1504
        %v1524 = vpop.f32.mrf.mxu0
        %v1525 = vadd.f32 %v1448, %v1524
        %v1526 = vpop.f32.mrf.mxu0
        %v1527 = vadd.f32 %v1450, %v1526
        %1528 = vmatmul.bf16.gmra.mxu0 %v1507
        %v1529 = vpop.f32.mrf.mxu0
        %v1530 = vadd.f32 %v1453, %v1529
        %v1531 = vpop.f32.mrf.mxu0
        %v1532 = vadd.f32 %v1455, %v1531
        %1533 = vmatmul.bf16.gmra.mxu0 %v1510
        %v1534 = vpop.f32.mrf.mxu0
        %v1535 = vadd.f32 %v1458, %v1534
        %v1536 = vpop.f32.mrf.mxu0
        %v1537 = vadd.f32 %v1460, %v1536
        %1538 = vmatmul.bf16.gmra.mxu0 %v1513
        %v1539 = vpop.f32.mrf.mxu0
        %v1540 = vadd.f32 %v1463, %v1539
        %v1541 = vpop.f32.mrf.mxu0
        %v1542 = vadd.f32 %v1465, %v1541
        %1543 = vdwg.mxu0
        %v1544 = vpack.c.bf16 %v1353, %v1352
        %s1545 = scalar_lea.vmem %s3, 96
        %v1546 = vld [vmem:[%s1545] sm:$0xf]
        %v1547 = vld [vmem:[%s1545 + $0x4] sm:$0xf]
        %v1548 = vld [vmem:[%s1545 + $0x8] sm:$0xf]
        %v1549 = vld [vmem:[%s1545 + $0xc] sm:$0xf]
        %v1550 = vld [vmem:[%s1545 + $0x10] sm:$0xf]
        %v1551 = vld [vmem:[%s1545 + $0x14] sm:$0xf]
        %v1552 = vld [vmem:[%s1545 + $0x18] sm:$0xf]
        %v1553 = vld [vmem:[%s1545 + $0x1c] sm:$0xf]
        %v1554 = vld [vmem:[%s1545 + $0x20] sm:$0xf]
        %v1555 = vld [vmem:[%s1545 + $0x24] sm:$0xf]
        %v1556 = vld [vmem:[%s1545 + $0x28] sm:$0xf]
        %v1557 = vld [vmem:[%s1545 + $0x2c] sm:$0xf]
        %v1570 = vunpack.c.l.b16 %v1546
        %v1571 = vunpack.c.l.b16 %v1547
        %v1572 = vunpack.c.l.b16 %v1548
        %v1573 = vunpack.c.l.b16 %v1549
        %v1574 = vunpack.c.l.b16 %v1550
        %v1575 = vunpack.c.l.b16 %v1551
        %v1576 = vunpack.c.l.b16 %v1552
        %v1577 = vunpack.c.l.b16 %v1553
        %v1578 = vunpack.c.l.b16 %v1554
        %v1579 = vunpack.c.l.b16 %v1555
        %v1580 = vunpack.c.l.b16 %v1556
        %v1581 = vunpack.c.l.b16 %v1557
        %v1582 = vpack.c.b16 %v1571, %v1570
        %v1583 = vpack.c.b16 %v1573, %v1572
        %v1584 = vpack.c.b16 %v1575, %v1574
        %v1585 = vpack.c.b16 %v1577, %v1576
        %v1586 = vpack.c.b16 %v1579, %v1578
        %v1587 = vpack.c.b16 %v1581, %v1580
        %v1595 = vsel %vm1425, %v1544, 0
        %1597 = vmatpush.bf16.msra.mxu0 0
        %1598 = vmatpush.bf16.msra.mxu0 0
        %1599 = vmatpush.bf16.msra.mxu0 %v1587
        %1600 = vmatpush.bf16.msra.mxu0 %v1586
        %1601 = vmatpush.bf16.msra.mxu0 %v1585
        %1602 = vmatpush.bf16.msra.mxu0 %v1584
        %1603 = vmatpush.bf16.msra.mxu0 %v1583
        %1604 = vmatpush.bf16.msra.mxu0 %v1582
        %1605 = vmatmul.bf16.gmra.mxu0 %v1507
        %v1606 = vpop.f32.mrf.mxu0
        %v1607 = vadd.f32 0.0, %v1606
        %v1608 = vpop.f32.mrf.mxu0
        %v1609 = vadd.f32 0.0, %v1608
        %1610 = vmatmul.bf16.gmra.mxu0 %v1510
        %v1611 = vpop.f32.mrf.mxu0
        %v1612 = vadd.f32 0.0, %v1611
        %v1613 = vpop.f32.mrf.mxu0
        %v1614 = vadd.f32 0.0, %v1613
        %1615 = vmatmul.bf16.gmra.mxu0 %v1513
        %v1616 = vpop.f32.mrf.mxu0
        %v1617 = vadd.f32 0.0, %v1616
        %v1618 = vpop.f32.mrf.mxu0
        %v1619 = vadd.f32 0.0, %v1618
        %1620 = vmatmul.bf16.gmra.mxu0 %v1595
        %v1621 = vpop.f32.mrf.mxu0
        %v1622 = vadd.f32 0.0, %v1621
        %v1623 = vpop.f32.mrf.mxu0
        %v1624 = vadd.f32 0.0, %v1623
        %1625 = vdwg.mxu0
        %v1626 = vadd.f32 %v1525, %v1607
        %v1627 = vadd.f32 %v1527, %v1609
        %v1628 = vadd.f32 %v1530, %v1612
        %v1629 = vadd.f32 %v1532, %v1614
        %v1630 = vadd.f32 %v1535, %v1617
        %v1631 = vadd.f32 %v1537, %v1619
        %v1632 = vadd.f32 %v1540, %v1622
        %v1633 = vadd.f32 %v1542, %v1624
        %v1634 = vpack.c.bf16 %v1354, %v1353
        %s1635 = scalar_lea.vmem %s3, 144
        %v1636 = vld [vmem:[%s1635] sm:$0xf]
        %v1637 = vld [vmem:[%s1635 + $0x4] sm:$0xf]
        %v1638 = vld [vmem:[%s1635 + $0x8] sm:$0xf]
        %v1639 = vld [vmem:[%s1635 + $0xc] sm:$0xf]
        %v1640 = vld [vmem:[%s1635 + $0x10] sm:$0xf]
        %v1641 = vld [vmem:[%s1635 + $0x14] sm:$0xf]
        %v1642 = vld [vmem:[%s1635 + $0x18] sm:$0xf]
        %v1643 = vld [vmem:[%s1635 + $0x1c] sm:$0xf]
        %v1644 = vld [vmem:[%s1635 + $0x20] sm:$0xf]
        %v1645 = vld [vmem:[%s1635 + $0x24] sm:$0xf]
        %v1646 = vld [vmem:[%s1635 + $0x28] sm:$0xf]
        %v1647 = vld [vmem:[%s1635 + $0x2c] sm:$0xf]
        %v1660 = vunpack.c.l.b16 %v1636
        %v1661 = vunpack.c.l.b16 %v1637
        %v1662 = vunpack.c.l.b16 %v1638
        %v1663 = vunpack.c.l.b16 %v1639
        %v1664 = vunpack.c.l.b16 %v1640
        %v1665 = vunpack.c.l.b16 %v1641
        %v1666 = vunpack.c.l.b16 %v1642
        %v1667 = vunpack.c.l.b16 %v1643
        %v1668 = vunpack.c.l.b16 %v1644
        %v1669 = vunpack.c.l.b16 %v1645
        %v1670 = vunpack.c.l.b16 %v1646
        %v1671 = vunpack.c.l.b16 %v1647
        %v1672 = vpack.c.b16 %v1661, %v1660
        %v1673 = vpack.c.b16 %v1663, %v1662
        %v1674 = vpack.c.b16 %v1665, %v1664
        %v1675 = vpack.c.b16 %v1667, %v1666
        %v1676 = vpack.c.b16 %v1669, %v1668
        %v1677 = vpack.c.b16 %v1671, %v1670
        %v1685 = vsel %vm1425, %v1634, 0
        %1687 = vmatpush.bf16.msra.mxu0 0
        %1688 = vmatpush.bf16.msra.mxu0 0
        %1689 = vmatpush.bf16.msra.mxu0 %v1677
        %1690 = vmatpush.bf16.msra.mxu0 %v1676
        %1691 = vmatpush.bf16.msra.mxu0 %v1675
        %1692 = vmatpush.bf16.msra.mxu0 %v1674
        %1693 = vmatpush.bf16.msra.mxu0 %v1673
        %1694 = vmatpush.bf16.msra.mxu0 %v1672
        %1695 = vmatmul.bf16.gmra.mxu0 %v1430
        %v1696 = vpop.f32.mrf.mxu0
        %v1697 = vadd.f32 0.0, %v1696
        %v1698 = vpop.f32.mrf.mxu0
        %v1699 = vadd.f32 0.0, %v1698
        %1700 = vmatmul.bf16.gmra.mxu0 %v1433
        %v1701 = vpop.f32.mrf.mxu0
        %v1702 = vadd.f32 0.0, %v1701
        %v1703 = vpop.f32.mrf.mxu0
        %v1704 = vadd.f32 0.0, %v1703
        %1705 = vmatmul.bf16.gmra.mxu0 %v1436
        %v1706 = vpop.f32.mrf.mxu0
        %v1707 = vadd.f32 0.0, %v1706
        %v1708 = vpop.f32.mrf.mxu0
        %v1709 = vadd.f32 0.0, %v1708
        %1710 = vmatmul.bf16.gmra.mxu0 %v1685
        %v1711 = vpop.f32.mrf.mxu0
        %v1712 = vadd.f32 0.0, %v1711
        %v1713 = vpop.f32.mrf.mxu0
        %v1714 = vadd.f32 0.0, %v1713
        %1715 = vdwg.mxu0
        %v1716 = vadd.f32 %v1626, %v1697
        %v1717 = vadd.f32 %v1627, %v1699
        %v1718 = vadd.f32 %v1628, %v1702
        %v1719 = vadd.f32 %v1629, %v1704
        %v1720 = vadd.f32 %v1630, %v1707
        %v1721 = vadd.f32 %v1631, %v1709
        %v1722 = vadd.f32 %v1632, %v1712
        %v1723 = vadd.f32 %v1633, %v1714
        %v1724 = vpack.c.bf16 %v1355, %v1354
        %s1725 = scalar_lea.vmem %s3, 192
        %v1726 = vld [vmem:[%s1725] sm:$0xf]
        %v1727 = vld [vmem:[%s1725 + $0x4] sm:$0xf]
        %v1728 = vld [vmem:[%s1725 + $0x8] sm:$0xf]
        %v1729 = vld [vmem:[%s1725 + $0xc] sm:$0xf]
        %v1730 = vld [vmem:[%s1725 + $0x10] sm:$0xf]
        %v1731 = vld [vmem:[%s1725 + $0x14] sm:$0xf]
        %v1732 = vld [vmem:[%s1725 + $0x18] sm:$0xf]
        %v1733 = vld [vmem:[%s1725 + $0x1c] sm:$0xf]
        %v1734 = vld [vmem:[%s1725 + $0x20] sm:$0xf]
        %v1735 = vld [vmem:[%s1725 + $0x24] sm:$0xf]
        %v1736 = vld [vmem:[%s1725 + $0x28] sm:$0xf]
        %v1737 = vld [vmem:[%s1725 + $0x2c] sm:$0xf]
        %v1750 = vunpack.c.l.b16 %v1726
        %v1751 = vunpack.c.l.b16 %v1727
        %v1752 = vunpack.c.l.b16 %v1728
        %v1753 = vunpack.c.l.b16 %v1729
        %v1754 = vunpack.c.l.b16 %v1730
        %v1755 = vunpack.c.l.b16 %v1731
        %v1756 = vunpack.c.l.b16 %v1732
        %v1757 = vunpack.c.l.b16 %v1733
        %v1758 = vunpack.c.l.b16 %v1734
        %v1759 = vunpack.c.l.b16 %v1735
        %v1760 = vunpack.c.l.b16 %v1736
        %v1761 = vunpack.c.l.b16 %v1737
        %v1762 = vpack.c.b16 %v1751, %v1750
        %v1763 = vpack.c.b16 %v1753, %v1752
        %v1764 = vpack.c.b16 %v1755, %v1754
        %v1765 = vpack.c.b16 %v1757, %v1756
        %v1766 = vpack.c.b16 %v1759, %v1758
        %v1767 = vpack.c.b16 %v1761, %v1760
        %v1775 = vsel %vm1425, %v1724, 0
        %1777 = vmatpush.bf16.msra.mxu0 0
        %1778 = vmatpush.bf16.msra.mxu0 0
        %1779 = vmatpush.bf16.msra.mxu0 %v1767
        %1780 = vmatpush.bf16.msra.mxu0 %v1766
        %1781 = vmatpush.bf16.msra.mxu0 %v1765
        %1782 = vmatpush.bf16.msra.mxu0 %v1764
        %1783 = vmatpush.bf16.msra.mxu0 %v1763
        %1784 = vmatpush.bf16.msra.mxu0 %v1762
        %1785 = vmatmul.bf16.gmra.mxu0 %v1510
        %v1786 = vpop.f32.mrf.mxu0
        %v1787 = vadd.f32 0.0, %v1786
        %v1788 = vpop.f32.mrf.mxu0
        %v1789 = vadd.f32 0.0, %v1788
        %1790 = vmatmul.bf16.gmra.mxu0 %v1513
        %v1791 = vpop.f32.mrf.mxu0
        %v1792 = vadd.f32 0.0, %v1791
        %v1793 = vpop.f32.mrf.mxu0
        %v1794 = vadd.f32 0.0, %v1793
        %1795 = vmatmul.bf16.gmra.mxu0 %v1595
        %v1796 = vpop.f32.mrf.mxu0
        %v1797 = vadd.f32 0.0, %v1796
        %v1798 = vpop.f32.mrf.mxu0
        %v1799 = vadd.f32 0.0, %v1798
        %1800 = vmatmul.bf16.gmra.mxu0 %v1775
        %v1801 = vpop.f32.mrf.mxu0
        %v1802 = vadd.f32 0.0, %v1801
        %v1803 = vpop.f32.mrf.mxu0
        %v1804 = vadd.f32 0.0, %v1803
        %1805 = vdwg.mxu0
        %v1806 = vadd.f32 %v1716, %v1787
        %v1807 = vadd.f32 %v1717, %v1789
        %v1808 = vadd.f32 %v1718, %v1792
        %v1809 = vadd.f32 %v1719, %v1794
        %v1810 = vadd.f32 %v1720, %v1797
        %v1811 = vadd.f32 %v1721, %v1799
        %v1812 = vadd.f32 %v1722, %v1802
        %v1813 = vadd.f32 %v1723, %v1804
        %v1814 = vld [vmem:[%s4] sm:$0x1]
        %v1816 = vperm.slane %v1814, 0
        %v1818 = vadd.f32 %v1806, %v1816
        %v1819 = vadd.f32 %v1807, %v1816
        %v1820 = vadd.f32 %v1808, %v1816
        %v1821 = vadd.f32 %v1809, %v1816
        %v1822 = vadd.f32 %v1810, %v1816
        %v1823 = vadd.f32 %v1811, %v1816
        %v1824 = vadd.f32 %v1812, %v1816
        %v1825 = vadd.f32 %v1813, %v1816
        %v1826 = vmax.f32 %v1818, 0.0
        %v1827 = vmax.f32 %v1819, 0.0
        %v1828 = vmax.f32 %v1820, 0.0
        %v1829 = vmax.f32 %v1821, 0.0
        %v1830 = vmax.f32 %v1822, 0.0
        %v1831 = vmax.f32 %v1823, 0.0
        %v1832 = vmax.f32 %v1824, 0.0
        %v1833 = vmax.f32 %v1825, 0.0
        %1842 = vrot.lane.b32.xlu0 %v1826, 120
        %v1843 = vpop.permute.xlu0 %1842
        %1844 = vrot.lane.b32.xlu0 %v1827, 120
        %v1845 = vpop.permute.xlu0 %1844
        %1846 = vrot.lane.b32.xlu0 %v1828, 120
        %v1847 = vpop.permute.xlu0 %1846
        %1848 = vrot.lane.b32.xlu0 %v1829, 120
        %v1849 = vpop.permute.xlu0 %1848
        %1850 = vrot.lane.b32.xlu0 %v1830, 120
        %v1851 = vpop.permute.xlu0 %1850
        %1852 = vrot.lane.b32.xlu0 %v1831, 120
        %v1853 = vpop.permute.xlu0 %1852
        %1854 = vrot.lane.b32.xlu0 %v1832, 120
        %v1855 = vpop.permute.xlu0 %1854
        %1856 = vrot.lane.b32.xlu0 %v1833, 120
        %v1857 = vpop.permute.xlu0 %1856
        %v1866 = vmax.f32 %v1826, %v1843
        %v1867 = vmax.f32 %v1827, %v1845
        %v1868 = vmax.f32 %v1828, %v1847
        %v1869 = vmax.f32 %v1829, %v1849
        %v1870 = vmax.f32 %v1830, %v1851
        %v1871 = vmax.f32 %v1831, %v1853
        %v1872 = vmax.f32 %v1832, %v1855
        %v1873 = vmax.f32 %v1833, %v1857
        %1874 = vrot.lane.b32.xlu0 %v1826, 112
        %v1875 = vpop.permute.xlu0 %1874
        %1876 = vrot.lane.b32.xlu0 %v1827, 112
        %v1877 = vpop.permute.xlu0 %1876
        %1878 = vrot.lane.b32.xlu0 %v1828, 112
        %v1879 = vpop.permute.xlu0 %1878
        %1880 = vrot.lane.b32.xlu0 %v1829, 112
        %v1881 = vpop.permute.xlu0 %1880
        %1882 = vrot.lane.b32.xlu0 %v1830, 112
        %v1883 = vpop.permute.xlu0 %1882
        %1884 = vrot.lane.b32.xlu0 %v1831, 112
        %v1885 = vpop.permute.xlu0 %1884
        %1886 = vrot.lane.b32.xlu0 %v1832, 112
        %v1887 = vpop.permute.xlu0 %1886
        %1888 = vrot.lane.b32.xlu0 %v1833, 112
        %v1889 = vpop.permute.xlu0 %1888
        %v1898 = vmax.f32 %v1866, %v1875
        %v1899 = vmax.f32 %v1867, %v1877
        %v1900 = vmax.f32 %v1868, %v1879
        %v1901 = vmax.f32 %v1869, %v1881
        %v1902 = vmax.f32 %v1870, %v1883
        %v1903 = vmax.f32 %v1871, %v1885
        %v1904 = vmax.f32 %v1872, %v1887
        %v1905 = vmax.f32 %v1873, %v1889
        %1906 = vrot.lane.b32.xlu0 %v1826, 104
        %v1907 = vpop.permute.xlu0 %1906
        %1908 = vrot.lane.b32.xlu0 %v1827, 104
        %v1909 = vpop.permute.xlu0 %1908
        %1910 = vrot.lane.b32.xlu0 %v1828, 104
        %v1911 = vpop.permute.xlu0 %1910
        %1912 = vrot.lane.b32.xlu0 %v1829, 104
        %v1913 = vpop.permute.xlu0 %1912
        %1914 = vrot.lane.b32.xlu0 %v1830, 104
        %v1915 = vpop.permute.xlu0 %1914
        %1916 = vrot.lane.b32.xlu0 %v1831, 104
        %v1917 = vpop.permute.xlu0 %1916
        %1918 = vrot.lane.b32.xlu0 %v1832, 104
        %v1919 = vpop.permute.xlu0 %1918
        %1920 = vrot.lane.b32.xlu0 %v1833, 104
        %v1921 = vpop.permute.xlu0 %1920
        %v1930 = vmax.f32 %v1898, %v1907
        %v1931 = vmax.f32 %v1899, %v1909
        %v1932 = vmax.f32 %v1900, %v1911
        %v1933 = vmax.f32 %v1901, %v1913
        %v1934 = vmax.f32 %v1902, %v1915
        %v1935 = vmax.f32 %v1903, %v1917
        %v1936 = vmax.f32 %v1904, %v1919
        %v1937 = vmax.f32 %v1905, %v1921
        %1938 = vrot.lane.b32.xlu0 %v1826, 96
        %v1939 = vpop.permute.xlu0 %1938
        %1940 = vrot.lane.b32.xlu0 %v1827, 96
        %v1941 = vpop.permute.xlu0 %1940
        %1942 = vrot.lane.b32.xlu0 %v1828, 96
        %v1943 = vpop.permute.xlu0 %1942
        %1944 = vrot.lane.b32.xlu0 %v1829, 96
        %v1945 = vpop.permute.xlu0 %1944
        %1946 = vrot.lane.b32.xlu0 %v1830, 96
        %v1947 = vpop.permute.xlu0 %1946
        %1948 = vrot.lane.b32.xlu0 %v1831, 96
        %v1949 = vpop.permute.xlu0 %1948
        %1950 = vrot.lane.b32.xlu0 %v1832, 96
        %v1951 = vpop.permute.xlu0 %1950
        %1952 = vrot.lane.b32.xlu0 %v1833, 96
        %v1953 = vpop.permute.xlu0 %1952
        %v1962 = vmax.f32 %v1930, %v1939
        %v1963 = vmax.f32 %v1931, %v1941
        %v1964 = vmax.f32 %v1932, %v1943
        %v1965 = vmax.f32 %v1933, %v1945
        %v1966 = vmax.f32 %v1934, %v1947
        %v1967 = vmax.f32 %v1935, %v1949
        %v1968 = vmax.f32 %v1936, %v1951
        %v1969 = vmax.f32 %v1937, %v1953
        %v1970 = vmax.f32 %v1962, %v1963
        %v1971 = vmax.f32 %v1963, %v1964
        %v1972 = vmax.f32 %v1964, %v1965
        %v1973 = vmax.f32 %v1965, %v1966
        %v1974 = vmax.f32 %v1970, %v1964
        %v1975 = vmax.f32 %v1971, %v1965
        %v1976 = vmax.f32 %v1972, %v1966
        %v1977 = vmax.f32 %v1973, %v1967
        %v1978 = vmax.f32 %v1974, %v1965
        %v1979 = vmax.f32 %v1975, %v1966
        %v1980 = vmax.f32 %v1976, %v1967
        %v1981 = vmax.f32 %v1977, %v1968
        %v1982 = vmax.f32 %v1978, %v1966
        %v1983 = vmax.f32 %v1979, %v1967
        %v1984 = vmax.f32 %v1980, %v1968
        %v1985 = vmax.f32 %v1981, %v1969
        %v1986 = vpack.c.bf16 %v1982, %v1982
        %v1987 = vld [vmem:[%s5] sm:$0xf]
        %v1988 = vld [vmem:[%s5 + $0x4] sm:$0xf]
        %v1989 = vld [vmem:[%s5 + $0x8] sm:$0xf]
        %v1990 = vld [vmem:[%s5 + $0xc] sm:$0xf]
        %v1991 = vpack.c.bf16 %v1983, %v1983
        %s1992 = scalar_lea.vmem %s5, 16
        %v1993 = vld [vmem:[%s1992] sm:$0xf]
        %v1994 = vld [vmem:[%s1992 + $0x4] sm:$0xf]
        %v1995 = vld [vmem:[%s1992 + $0x8] sm:$0xf]
        %v1996 = vld [vmem:[%s1992 + $0xc] sm:$0xf]
        %v2001 = vunpack.c.l.b16 %v1993
        %v2002 = vunpack.c.l.b16 %v1994
        %v2003 = vunpack.c.l.b16 %v1995
        %v2004 = vunpack.c.l.b16 %v1996
        %v2005 = vpack.c.b16 %v2002, %v2001
        %v2006 = vpack.c.b16 %v2004, %v2003
        %vm2009 = vcmask 261120
        %v2011 = vsel %vm2009, %v1991, 0
        %2013 = vmatpush.bf16.msra.mxu0 0
        %2014 = vmatpush.bf16.msra.mxu0 0
        %2015 = vmatpush.bf16.msra.mxu0 0
        %2016 = vmatpush.bf16.msra.mxu0 0
        %2017 = vmatpush.bf16.msra.mxu0 0
        %2018 = vmatpush.bf16.msra.mxu0 0
        %2019 = vmatpush.bf16.msra.mxu0 %v2006
        %2020 = vmatpush.bf16.msra.mxu0 %v2005
        %2021 = vmatmul.bf16.gmra.mxu0 %v2011
        %v2022 = vpop.f32.mrf.mxu0
        %v2023 = vadd.f32 0.0, %v2022
        %v2024 = vpop.f32.mrf.mxu0
        %2025 = vdwg.mxu0
        %v2030 = vunpack.c.l.b16 %v1987
        %v2031 = vunpack.c.l.b16 %v1988
        %v2032 = vunpack.c.l.b16 %v1989
        %v2033 = vunpack.c.l.b16 %v1990
        %v2034 = vpack.c.b16 %v2031, %v2030
        %v2035 = vpack.c.b16 %v2033, %v2032
        %v2039 = vsel %vm2009, %v1986, 0
        %2041 = vmatpush.bf16.msra.mxu0 0
        %2042 = vmatpush.bf16.msra.mxu0 0
        %2043 = vmatpush.bf16.msra.mxu0 0
        %2044 = vmatpush.bf16.msra.mxu0 0
        %2045 = vmatpush.bf16.msra.mxu0 0
        %2046 = vmatpush.bf16.msra.mxu0 0
        %2047 = vmatpush.bf16.msra.mxu0 %v2035
        %2048 = vmatpush.bf16.msra.mxu0 %v2034
        %2049 = vmatmul.bf16.gmra.mxu0 %v2039
        %v2050 = vpop.f32.mrf.mxu0
        %v2051 = vadd.f32 %v2023, %v2050
        %v2052 = vpop.f32.mrf.mxu0
        %2053 = vdwg.mxu0
        %v2054 = vpack.c.bf16 %v1984, %v1984
        %s2055 = scalar_lea.vmem %s5, 32
        %v2056 = vld [vmem:[%s2055] sm:$0xf]
        %v2057 = vld [vmem:[%s2055 + $0x4] sm:$0xf]
        %v2058 = vld [vmem:[%s2055 + $0x8] sm:$0xf]
        %v2059 = vld [vmem:[%s2055 + $0xc] sm:$0xf]
        %v2064 = vunpack.c.l.b16 %v2056
        %v2065 = vunpack.c.l.b16 %v2057
        %v2066 = vunpack.c.l.b16 %v2058
        %v2067 = vunpack.c.l.b16 %v2059
        %v2068 = vpack.c.b16 %v2065, %v2064
        %v2069 = vpack.c.b16 %v2067, %v2066
        %v2073 = vsel %vm2009, %v2054, 0
        %2075 = vmatpush.bf16.msra.mxu0 0
        %2076 = vmatpush.bf16.msra.mxu0 0
        %2077 = vmatpush.bf16.msra.mxu0 0
        %2078 = vmatpush.bf16.msra.mxu0 0
        %2079 = vmatpush.bf16.msra.mxu0 0
        %2080 = vmatpush.bf16.msra.mxu0 0
        %2081 = vmatpush.bf16.msra.mxu0 %v2069
        %2082 = vmatpush.bf16.msra.mxu0 %v2068
        %2083 = vmatmul.bf16.gmra.mxu0 %v2073
        %v2084 = vpop.f32.mrf.mxu0
        %v2085 = vadd.f32 0.0, %v2084
        %v2086 = vpop.f32.mrf.mxu0
        %2087 = vdwg.mxu0
        %v2088 = vadd.f32 %v2051, %v2085
        %v2089 = vpack.c.bf16 %v1985, %v1985
        %s2090 = scalar_lea.vmem %s5, 48
        %v2091 = vld [vmem:[%s2090] sm:$0xf]
        %v2092 = vld [vmem:[%s2090 + $0x4] sm:$0xf]
        %v2093 = vld [vmem:[%s2090 + $0x8] sm:$0xf]
        %v2094 = vld [vmem:[%s2090 + $0xc] sm:$0xf]
        %v2099 = vunpack.c.l.b16 %v2091
        %v2100 = vunpack.c.l.b16 %v2092
        %v2101 = vunpack.c.l.b16 %v2093
        %v2102 = vunpack.c.l.b16 %v2094
        %v2103 = vpack.c.b16 %v2100, %v2099
        %v2104 = vpack.c.b16 %v2102, %v2101
        %v2108 = vsel %vm2009, %v2089, 0
        %2110 = vmatpush.bf16.msra.mxu0 0
        %2111 = vmatpush.bf16.msra.mxu0 0
        %2112 = vmatpush.bf16.msra.mxu0 0
        %2113 = vmatpush.bf16.msra.mxu0 0
        %2114 = vmatpush.bf16.msra.mxu0 0
        %2115 = vmatpush.bf16.msra.mxu0 0
        %2116 = vmatpush.bf16.msra.mxu0 %v2104
        %2117 = vmatpush.bf16.msra.mxu0 %v2103
        %2118 = vmatmul.bf16.gmra.mxu0 %v2108
        %v2119 = vpop.f32.mrf.mxu0
        %v2120 = vadd.f32 0.0, %v2119
        %v2121 = vpop.f32.mrf.mxu0
        %2122 = vdwg.mxu0
        %v2123 = vadd.f32 %v2088, %v2120
        %v2124 = vld [vmem:[%s6] sm:$0x1]
        %v2126 = vperm.slane %v2124, 0
        %v2128 = vadd.f32 %v2123, %v2126
        %vm2129 = vcmask 64512
        %2130 = vst.msk [vmem:[%s404] sm:$0xff] %vm2129, %v2128
        %p2131 = scmp.lt.s32.totalorder %s19, 1
        %s2132 = scalar_select %p2131, %s19, 1
        %s2133 = smul.addr %s2132, 8
        %s2134 = scalar_lea.vmem %s7, %s2133
        // Predicated region
        $region91: #{tpu_custom_call.1} parent=81 // pred_check
          %p2135 = pneg %p189
        $region92: #{tpu_custom_call.1} parent=81 // pred_check_branch
          %2137 = sbr.rel (%p2135) target = $region94
        $region93: #{tpu_custom_call.1} parent=81 // pred_region
          _
        $region94: #{tpu_custom_call.1} parent=81 // pred_fallthru
          _
      $region82: #{tpu_custom_call.1} parent=5 // pred_fallthru
        _
      %p2138 = scmp.le.s32.totalorder 2, %s14
      // Predicated region
      $region95: #{tpu_custom_call.1} parent=5 // pred_check
        %p2139 = pneg %p2138
      $region96: #{tpu_custom_call.1} parent=5 // pred_check_branch
        %2141 = sbr.rel (%p2139) target = $region98
      $region97: #{tpu_custom_call.1} parent=5 // pred_region
        %s2142 = ssub.s32 %s14, 2
        // Predicated region
        $region99: #{tpu_custom_call.1} parent=97 // pred_check
          %p2143 = pneg %p195
        $region100: #{tpu_custom_call.1} parent=97 // pred_check_branch
          %2145 = sbr.rel (%p2143) target = $region102
        $region101: #{tpu_custom_call.1} parent=97 // pred_region
          %p2146 = scmp.lt.s32.totalorder %s20, 1
          %s2147 = scalar_select %p2146, %s20, 1
          %s2148 = smul.addr %s2147, 8
          %s2149 = scalar_lea.vmem %s7, %s2148
        $region102: #{tpu_custom_call.1} parent=97 // pred_fallthru
          _
      $region98: #{tpu_custom_call.1} parent=5 // pred_fallthru
        _
    $region6: #{tpu_custom_call.1} parent=1 // loop_footer
      %s18 = sadd.s32 1, %s14
    $region7: #{tpu_custom_call.1} parent=1 // loop_footer_branch
      %13 = sbr.rel target = $region3
    $region8: #{tpu_custom_call.1} parent=1 // loop_exit
      _
    %2150 = vsyncpa [#allocation4], 1
    %s2151 = scalar_lea.sflag [#allocation4], 1
    %2152 = vsyncpa %s2151, 1

</llo_original>
